<compile_context>
chip_gen: v7x
topology: tpu7x:2x2x1
jax: 0.10.0
libtpu: 0.0.40
codegen_flags: <defaults>
</compile_context>

<pallas_src>
import math
import functools

import jax
import jax.numpy as jnp
from jax.experimental import pallas as pl
from jax.experimental.pallas import tpu as pltpu


# ----------------------------------------------------------------------------
# Tile-size selection (generation aware, defensively queried)
# ----------------------------------------------------------------------------
def _tile_caps():
    tm, tn, tk = 512, 256, 256
    try:  # v5e's MXU is 4x128^2 -> wider tiles buy nothing there.
        name = str(getattr(pltpu.get_tpu_info(), "chip_version", "")).lower()
        if "v5" in name:
            tm, tn, tk = 128, 128, 128
    except Exception:
        pass
    return tm, tn, tk


_TM_CAP, _TN_CAP, _TK_CAP = _tile_caps()


def _pick_tile(dim, cap):
    """Largest of (512,256,128) <= cap dividing dim, else the full dim.

    A block equal to the full array dim is always legal (no (8,128) divisibility
    requirement), so ragged/small dims get one full-extent block and no padding.
    """
    for t in (512, 256, 128):
        if t <= cap and dim % t == 0:
            return t
    return dim


def _apply_act(y, act):
    if act == "relu":
        return jnp.maximum(y, 0.0)
    if act == "sigmoid":
        return 1.0 / (1.0 + jnp.exp(-y))
    # TODO(synk): exact-erf GELU epilogues stay in XLA glue (erf lowering inside
    # Mosaic is not relied upon here).
    return y


# ----------------------------------------------------------------------------
# Pallas kernels
# ----------------------------------------------------------------------------
def _mm_single_kernel(a_ref, w_ref, b_ref, o_ref, *, act):
    # One K step: write straight to the output, no accumulator scratch.
    y = jnp.dot(a_ref[...], w_ref[...], preferred_element_type=jnp.float32)
    y = y + b_ref[...]
    o_ref[...] = _apply_act(y, act).astype(o_ref.dtype)


def _mm_acc_kernel(a_ref, w_ref, b_ref, o_ref, acc_ref, *, act):
    @pl.when(pl.program_id(2) == 0)
    def _():
        acc_ref[...] = jnp.zeros_like(acc_ref)

    acc_ref[...] += jnp.dot(a_ref[...], w_ref[...],
                            preferred_element_type=jnp.float32)

    @pl.when(pl.program_id(2) == pl.num_programs(2) - 1)
    def _():
        y = acc_ref[...] + b_ref[...]
        o_ref[...] = _apply_act(y, act).astype(o_ref.dtype)


@functools.partial(jax.jit, static_argnames=("act",))
def pallas_matmul(a, w, bias, *, act="none"):
    """(M,K) @ (K,N) + bias (+ fused activation). bf16 operands, f32 accum."""
    M, K = a.shape
    K2, N = w.shape
    assert K == K2
    a = a.astype(jnp.bfloat16)
    w = w.astype(jnp.bfloat16)
    bias2 = bias.reshape(1, N).astype(jnp.float32)

    BM = _pick_tile(M, _TM_CAP)
    BN = _pick_tile(N, _TN_CAP)
    BK = _pick_tile(K, _TK_CAP)
    nk = K // BK
    if nk == 1:
        kernel = functools.partial(_mm_single_kernel, act=act)
        scratch = []
    else:
        kernel = functools.partial(_mm_acc_kernel, act=act)
        scratch = [pltpu.VMEM((BM, BN), jnp.float32)]

    return pl.pallas_call(
        kernel,
        out_shape=jax.ShapeDtypeStruct((M, N), jnp.float32),
        grid_spec=pltpu.PrefetchScalarGridSpec(
            num_scalar_prefetch=0,
            grid=(M // BM, N // BN, nk),
            in_specs=[pl.BlockSpec((BM, BK), lambda i, j, k: (i, k)),
                      pl.BlockSpec((BK, BN), lambda i, j, k: (k, j)),
                      pl.BlockSpec((1, BN), lambda i, j, k: (0, j))],
            out_specs=pl.BlockSpec((BM, BN), lambda i, j, k: (i, j)),
            scratch_shapes=scratch),
        compiler_params=pltpu.CompilerParams(
            dimension_semantics=("parallel", "parallel", "arbitrary")),
    )(a, w, bias2)


def _conv3x3_kernel(x_ref, w_ref, b_ref, o_ref, *, act, H, W):
    # x_ref: (1, H+2, W+2, Cin) bf16; w_ref: (9, Cin, Cout) bf16; b_ref: (1, Cout) f32
    cin = x_ref.shape[-1]
    cout = w_ref.shape[-1]
    xall = x_ref[0]                                    # (H+2, W+2, Cin), read once
    acc = jnp.zeros((H * W, cout), jnp.float32)
    for t in range(9):                                 # unrolled 9-tap accumulation
        dy, dx = divmod(t, 3)
        xs = xall[dy:dy + H, dx:dx + W, :].reshape(H * W, cin)
        acc = acc + jnp.dot(xs, w_ref[t], preferred_element_type=jnp.float32)
    y = _apply_act(acc + b_ref[...], act)
    o_ref[...] = y.reshape(1, H, W, cout).astype(o_ref.dtype)


@functools.partial(jax.jit, static_argnames=("act",))
def pallas_conv3x3(x, w9, bias, *, act="none"):
    """Conv2d(3x3, stride=1, pad=1) on NCHW input; weights pre-packed (9,Cin,Cout)."""
    B, C, H, W = x.shape
    Cout = w9.shape[-1]
    xh = jnp.pad(x.transpose(0, 2, 3, 1),
                 ((0, 0), (1, 1), (1, 1), (0, 0))).astype(jnp.bfloat16)
    out = pl.pallas_call(
        functools.partial(_conv3x3_kernel, act=act, H=H, W=W),
        out_shape=jax.ShapeDtypeStruct((B, H, W, Cout), jnp.float32),
        grid_spec=pltpu.PrefetchScalarGridSpec(
            num_scalar_prefetch=0,
            grid=(B,),
            in_specs=[pl.BlockSpec((1, H + 2, W + 2, C), lambda b: (b, 0, 0, 0)),
                      pl.BlockSpec((9, C, Cout), lambda b: (0, 0, 0)),
                      pl.BlockSpec((1, Cout), lambda b: (0, 0))],
            out_specs=pl.BlockSpec((1, H, W, Cout), lambda b: (b, 0, 0, 0))),
        compiler_params=pltpu.CompilerParams(
            dimension_semantics=("parallel",)),
    )(xh, w9.astype(jnp.bfloat16), bias.reshape(1, Cout).astype(jnp.float32))
    return out.transpose(0, 3, 1, 2)


def _norm_affine_kernel(x_ref, g_ref, b_ref, o_ref):
    x = x_ref[...]
    mu = jnp.mean(x, axis=-1, keepdims=True)
    var = jnp.mean(jnp.square(x - mu), axis=-1, keepdims=True)
    xn = (x - mu) * jax.lax.rsqrt(var + 1e-5)
    o_ref[...] = xn * g_ref[...] + b_ref[...]          # fused affine


@jax.jit
def pallas_norm_affine(x2d, gamma2d, beta2d):
    """Per-row zero-mean/unit-var normalization + fused scale/shift (eps=1e-5)."""
    return pl.pallas_call(
        _norm_affine_kernel,
        out_shape=jax.ShapeDtypeStruct(x2d.shape, jnp.float32),
    )(x2d.astype(jnp.float32), gamma2d.astype(jnp.float32),
      beta2d.astype(jnp.float32))


# ----------------------------------------------------------------------------
# JAX glue built on the Pallas kernels
# ----------------------------------------------------------------------------
def gelu(x):
    # torch nn.GELU()/F.gelu default = exact erf formulation (kept in XLA glue).
    return jax.nn.gelu(x, approximate=False)


def linear(x2d, wT, b, act="none"):
    """torch nn.Linear semantics; wT pre-stored as (in, out) bf16."""
    return pallas_matmul(x2d, wT, b, act=act)


def conv2d_3x3(x, w9, b, act="none"):
    return pallas_conv3x3(x, w9, b, act=act)


@functools.partial(jax.jit, static_argnums=(1,))
def group_norm(x, groups, w, b):
    B, C, H, W = x.shape
    cg = C // groups
    D = cg * H * W
    xr = x.reshape(B * groups, D)
    g2 = jnp.broadcast_to(w.reshape(groups, cg, 1), (groups, cg, H * W)).reshape(groups, D)
    b2 = jnp.broadcast_to(b.reshape(groups, cg, 1), (groups, cg, H * W)).reshape(groups, D)
    g2 = jnp.broadcast_to(g2[None], (B, groups, D)).reshape(B * groups, D)
    b2 = jnp.broadcast_to(b2[None], (B, groups, D)).reshape(B * groups, D)
    return pallas_norm_affine(xr, g2, b2).reshape(B, C, H, W)


@jax.jit
def layer_norm_chw(x, w, b):
    B, C, H, W = x.shape
    D = C * H * W
    g2 = jnp.broadcast_to(w.reshape(1, D), (B, D))
    b2 = jnp.broadcast_to(b.reshape(1, D), (B, D))
    return pallas_norm_affine(x.reshape(B, D), g2, b2).reshape(B, C, H, W)


def pixel_shuffle(x, r):
    B, C, H, W = x.shape
    Co = C // (r * r)
    x = x.reshape(B, Co, r, r, H, W).transpose(0, 1, 4, 2, 5, 3)
    return x.reshape(B, Co, H * r, W * r)


# ----------------------------------------------------------------------------
# Sub-modules
# ----------------------------------------------------------------------------
def spatial_attention(x, prm):
    avg_out = jnp.mean(x, axis=1, keepdims=True)
    min_out = jnp.min(x, axis=1, keepdims=True)
    max_out = jnp.max(x, axis=1, keepdims=True)
    cat = jnp.concatenate([min_out, avg_out, max_out], axis=1)         # (B,3,H,W)
    # torch conv has bias=False -> explicit zero bias; sigmoid fused in-kernel.
    return conv2d_3x3(cat, prm["sa_w"], prm["sa_b"], act="sigmoid")    # (B,1,H,W)


def channel_attention(x, prm):
    y = jnp.mean(x, axis=(2, 3))                                       # AdaptiveAvgPool2d(1)
    y = linear(y, prm["ca_w1"], prm["ca_b1"], act="relu")              # fused ReLU
    y = linear(y, prm["ca_w2"], prm["ca_b2"], act="sigmoid")           # fused Sigmoid
    return x * y[:, :, None, None]


def multihead_attention(x, prm, num_heads=8):
    """torch nn.MultiheadAttention, batch_first=False: x has shape (L, N, E)."""
    L, N, E = x.shape
    hd = E // num_heads
    qkv = linear(x.reshape(L * N, E), prm["in_proj_w"], prm["in_proj_b"])
    qkv = qkv.reshape(L, N, 3 * E)
    q, k, v = qkv[..., :E], qkv[..., E:2 * E], qkv[..., 2 * E:]

    def split_heads(t):
        return t.reshape(L, N * num_heads, hd).transpose(1, 0, 2)      # (N*nh, L, hd)

    q, k, v = split_heads(q), split_heads(k), split_heads(v)
    q = q * (1.0 / math.sqrt(hd))
    # TODO(synk): the per-head score/softmax/PV tensors here are tiny
    # (L == batch == 2); a dedicated pallas_call would be pure launch overhead,
    # so they stay in XLA glue.
    scores = jnp.einsum('bld,bmd->blm', q, k)
    attn = jax.nn.softmax(scores, axis=-1)
    out = jnp.einsum('blm,bmd->bld', attn, v)                          # (N*nh, L, hd)
    out = out.transpose(1, 0, 2).reshape(L, N, E)
    return linear(out.reshape(L * N, E),
                  prm["out_proj_w"], prm["out_proj_b"]).reshape(L, N, E)


def pbmsa(x, prm):
    B, C, H, W = x.shape
    p = prm["patch"]
    E = prm["pe_w"].shape[1]
    Hp, Wp = H // p, W // p
    NP = Hp * Wp
    # unfold + permute + reshape (channel-major patch flattening, as in torch)
    patches = x.reshape(B, C, Hp, p, Wp, p).transpose(0, 2, 4, 1, 3, 5)
    patches = patches.reshape(B, NP, C * p * p)
    emb = linear(patches.reshape(B * NP, C * p * p),
                 prm["pe_w"], prm["pe_b"]).reshape(B, NP, E)
    # nn.MultiheadAttention (batch_first=False) sees (L=B, N=NP, E) -- reproduced as-is.
    attn_out = multihead_attention(emb, prm)
    rest = linear(attn_out.reshape(B * NP, E),
                  prm["re_w"], prm["re_b"]).reshape(B, Hp, Wp, C, p, p)
    return rest.transpose(0, 3, 1, 4, 2, 5).reshape(B, C, H, W)


def attention_block(x, prm):
    x = group_norm(x, 8, prm["gn1_w"], prm["gn1_b"])
    sa_out = spatial_attention(x, prm)
    ca_out = channel_attention(x, prm)
    pb_out = pbmsa(x, prm)
    cat = jnp.concatenate([sa_out, ca_out, pb_out], axis=1)            # (B, 1+2C, H, W)
    h = gelu(group_norm(cat, 1, prm["gn2_w"], prm["gn2_b"]))
    h = conv2d_3x3(h, prm["conv_w"], prm["conv_b"])
    return layer_norm_chw(h, prm["ln_w"], prm["ln_b"])


def core_block(x, prm):
    x1 = x
    for ab in prm["blocks1"]:
        x1 = attention_block(x1, ab)
    x2 = x1
    for ab in prm["blocks2"]:
        x2 = attention_block(x2, ab)
    return x + x2


def res_core_blocks(x, prm):
    x1 = core_block(x, prm[0])
    x2 = core_block(x1, prm[1])
    x3 = core_block(x + x2, prm[2])
    x4 = core_block(x3, prm[3])
    x5 = core_block(x3 + x4, prm[4])
    x6 = core_block(x5, prm[5])
    return x5 + x6


def super_resolution_model(x, params):
    x1 = conv2d_3x3(x, params["feat_w"], params["feat_b"])
    x2 = res_core_blocks(x1, params["backbone"])
    x3 = gelu(conv2d_3x3(x1 + x2, params["c1_w"], params["c1_b"]))
    x4 = pixel_shuffle(x3, 2)
    x5 = gelu(conv2d_3x3(x4, params["c2_w"], params["c2_b"]))
    x6 = pixel_shuffle(x5, 2)
    x7 = conv2d_3x3(x6, params["c3_w"], params["c3_b"])
    return x7


# ----------------------------------------------------------------------------
# Deterministic parameter initialization (shapes follow the nn.Module __init__),
# weights pre-laid-out for the kernels and pre-cast to bf16 exactly once.
# ----------------------------------------------------------------------------
class _KeyGen:
    def __init__(self, seed):
        self._key = jax.random.PRNGKey(seed)
        self._n = 0

    def __call__(self):
        self._n += 1
        return jax.random.fold_in(self._key, self._n)


def _nrm(key, shape, scale=0.05):
    return scale * jax.random.normal(key, shape, dtype=jnp.float32)


def _conv_w9(kg, cout, cin):
    # torch layout (cout, cin, 3, 3) -> kernel layout (9, cin, cout), bf16 once.
    w = _nrm(kg(), (cout, cin, 3, 3))
    return w.transpose(2, 3, 1, 0).reshape(9, cin, cout).astype(jnp.bfloat16)


def _lin_wT(kg, out_f, in_f):
    # torch nn.Linear weight (out, in) -> stored transposed (in, out), bf16 once.
    return _nrm(kg(), (out_f, in_f)).T.astype(jnp.bfloat16)


def init_attention_block(kg, C, img, patch, E=256):
    return dict(
        patch=patch,
        gn1_w=jnp.ones((C,), jnp.float32), gn1_b=jnp.zeros((C,), jnp.float32),
        # SpatialAttention conv has bias=False in torch -> zero bias here.
        sa_w=_conv_w9(kg, 1, 3), sa_b=jnp.zeros((1,), jnp.float32),
        # ChannelAttention FCs have bias=False in torch -> zero biases here.
        ca_w1=_lin_wT(kg, C // 2, C), ca_b1=jnp.zeros((C // 2,), jnp.float32),
        ca_w2=_lin_wT(kg, C, C // 2), ca_b2=jnp.zeros((C,), jnp.float32),
        pe_w=_lin_wT(kg, E, patch * patch * C), pe_b=jnp.zeros((E,), jnp.float32),
        in_proj_w=_lin_wT(kg, 3 * E, E), in_proj_b=jnp.zeros((3 * E,), jnp.float32),
        out_proj_w=_lin_wT(kg, E, E), out_proj_b=jnp.zeros((E,), jnp.float32),
        re_w=_lin_wT(kg, patch * patch * C, E),
        re_b=jnp.zeros((patch * patch * C,), jnp.float32),
        conv_w=_conv_w9(kg, C, 1 + 2 * C), conv_b=jnp.zeros((C,), jnp.float32),
        gn2_w=jnp.ones((1 + 2 * C,), jnp.float32),
        gn2_b=jnp.zeros((1 + 2 * C,), jnp.float32),
        ln_w=jnp.ones((C, img, img), jnp.float32),
        ln_b=jnp.zeros((C, img, img), jnp.float32),
    )


def init_core_block(kg, C, img):
    return dict(
        blocks1=[init_attention_block(kg, C, img, p) for p in (2, 4)],
        blocks2=[init_attention_block(kg, C, img, p) for p in (4, 4)],
    )


def init_params(seed, img_size, first_conv_out_channels=32):
    kg = _KeyGen(seed)
    C = first_conv_out_channels
    return dict(
        feat_w=_conv_w9(kg, C, 3), feat_b=jnp.zeros((C,), jnp.float32),
        backbone=[init_core_block(kg, C, img_size) for _ in range(6)],
        c1_w=_conv_w9(kg, 256, C), c1_b=jnp.zeros((256,), jnp.float32),
        c2_w=_conv_w9(kg, 128, 64), c2_b=jnp.zeros((128,), jnp.float32),
        c3_w=_conv_w9(kg, 3, 32), c3_b=jnp.zeros((3,), jnp.float32),
    )


# ----------------------------------------------------------------------------
if __name__ == "__main__":
    IMG = 16   # feature-map size; divisible by patch sizes 2 and 4
    B = 2
    x = jax.random.normal(jax.random.PRNGKey(0), (B, 3, IMG, IMG), dtype=jnp.float32)
    params = init_params(seed=0, img_size=IMG, first_conv_out_channels=32)

    out = super_resolution_model(x, params)
    out = jax.block_until_ready(out)

    assert out.shape == (B, 3, IMG * 4, IMG * 4), out.shape
    assert bool(jnp.all(jnp.isfinite(out)))
    print("KERNEL_OK")
</pallas_src>

<mosaic_0001>
module attributes {stable_mosaic.version = 11 : i64} {
  func.func @_conv3x3_kernel(%arg0: i32, %arg1: memref<1x18x18x3xbf16, #tpu.memory_space<vmem>>, %arg2: memref<9x3x32xbf16, #tpu.memory_space<vmem>>, %arg3: memref<1x32xf32, #tpu.memory_space<vmem>>, %arg4: memref<1x16x16x32xf32, #tpu.memory_space<vmem>>) attributes {dimension_semantics = [#tpu.dimension_semantics<parallel>], iteration_bounds = array<i64: 2>, scalar_prefetch = 0 : i64, scratch_operands = 0 : i64, tpu.core_type = #tpu.core_type<tc>, window_params = [{transform_indices = @transform_0, window_bounds = array<i64: 1, 18, 18, 3>}, {pipeline_mode = #tpu.pipeline_mode<synchronous>, transform_indices = @transform_1, window_bounds = array<i64: 9, 3, 32>}, {pipeline_mode = #tpu.pipeline_mode<synchronous>, transform_indices = @transform_2, window_bounds = array<i64: 1, 32>}, {transform_indices = @transform_3, window_bounds = array<i64: 1, 16, 16, 32>}]} {
    %c0 = arith.constant 0 : index
    %c0_0 = arith.constant 0 : index
    %c0_1 = arith.constant 0 : index
    %c0_2 = arith.constant 0 : index
    %0 = vector.load %arg1[%c0, %c0_0, %c0_1, %c0_2] : memref<1x18x18x3xbf16, #tpu.memory_space<vmem>>, vector<1x18x18x3xbf16>
    %1 = vector.shape_cast %0 : vector<1x18x18x3xbf16> to vector<18x18x3xbf16>
    %cst = arith.constant 0.000000e+00 : f32
    %2 = vector.broadcast %cst : f32 to vector<256x32xf32>
    %3 = vector.extract_strided_slice %1 {offsets = [0, 0, 0], sizes = [16, 16, 3], strides = [1, 1, 1]} : vector<18x18x3xbf16> to vector<16x16x3xbf16>
    %4 = vector.shape_cast %3 : vector<16x16x3xbf16> to vector<256x3xbf16>
    %c0_3 = arith.constant 0 : index
    %c0_4 = arith.constant 0 : index
    %c0_5 = arith.constant 0 : index
    %5 = vector.load %arg2[%c0_3, %c0_4, %c0_5] : memref<9x3x32xbf16, #tpu.memory_space<vmem>>, vector<1x3x32xbf16>
    %6 = vector.shape_cast %5 : vector<1x3x32xbf16> to vector<3x32xbf16>
    %cst_6 = arith.constant dense<0.000000e+00> : vector<256x32xf32>
    %7 = tpu.matmul %4, %6, %cst_6 {dimension_numbers = #tpu.dot_dimension_numbers<[1], [0], [0], [1], [0, 0, 1, 1], [], []>} : vector<256x3xbf16>, vector<3x32xbf16>, vector<256x32xf32> -> vector<256x32xf32>
    %8 = arith.addf %2, %7 : vector<256x32xf32>
    %9 = vector.extract_strided_slice %1 {offsets = [0, 1, 0], sizes = [16, 16, 3], strides = [1, 1, 1]} : vector<18x18x3xbf16> to vector<16x16x3xbf16>
    %10 = vector.shape_cast %9 : vector<16x16x3xbf16> to vector<256x3xbf16>
    %c1 = arith.constant 1 : index
    %c0_7 = arith.constant 0 : index
    %c0_8 = arith.constant 0 : index
    %11 = vector.load %arg2[%c1, %c0_7, %c0_8] : memref<9x3x32xbf16, #tpu.memory_space<vmem>>, vector<1x3x32xbf16>
    %12 = vector.shape_cast %11 : vector<1x3x32xbf16> to vector<3x32xbf16>
    %cst_9 = arith.constant dense<0.000000e+00> : vector<256x32xf32>
    %13 = tpu.matmul %10, %12, %cst_9 {dimension_numbers = #tpu.dot_dimension_numbers<[1], [0], [0], [1], [0, 0, 1, 1], [], []>} : vector<256x3xbf16>, vector<3x32xbf16>, vector<256x32xf32> -> vector<256x32xf32>
    %14 = arith.addf %8, %13 : vector<256x32xf32>
    %15 = vector.extract_strided_slice %1 {offsets = [0, 2, 0], sizes = [16, 16, 3], strides = [1, 1, 1]} : vector<18x18x3xbf16> to vector<16x16x3xbf16>
    %16 = vector.shape_cast %15 : vector<16x16x3xbf16> to vector<256x3xbf16>
    %c2 = arith.constant 2 : index
    %c0_10 = arith.constant 0 : index
    %c0_11 = arith.constant 0 : index
    %17 = vector.load %arg2[%c2, %c0_10, %c0_11] : memref<9x3x32xbf16, #tpu.memory_space<vmem>>, vector<1x3x32xbf16>
    %18 = vector.shape_cast %17 : vector<1x3x32xbf16> to vector<3x32xbf16>
    %cst_12 = arith.constant dense<0.000000e+00> : vector<256x32xf32>
    %19 = tpu.matmul %16, %18, %cst_12 {dimension_numbers = #tpu.dot_dimension_numbers<[1], [0], [0], [1], [0, 0, 1, 1], [], []>} : vector<256x3xbf16>, vector<3x32xbf16>, vector<256x32xf32> -> vector<256x32xf32>
    %20 = arith.addf %14, %19 : vector<256x32xf32>
    %21 = vector.extract_strided_slice %1 {offsets = [1, 0, 0], sizes = [16, 16, 3], strides = [1, 1, 1]} : vector<18x18x3xbf16> to vector<16x16x3xbf16>
    %22 = vector.shape_cast %21 : vector<16x16x3xbf16> to vector<256x3xbf16>
    %c3 = arith.constant 3 : index
    %c0_13 = arith.constant 0 : index
    %c0_14 = arith.constant 0 : index
    %23 = vector.load %arg2[%c3, %c0_13, %c0_14] : memref<9x3x32xbf16, #tpu.memory_space<vmem>>, vector<1x3x32xbf16>
    %24 = vector.shape_cast %23 : vector<1x3x32xbf16> to vector<3x32xbf16>
    %cst_15 = arith.constant dense<0.000000e+00> : vector<256x32xf32>
    %25 = tpu.matmul %22, %24, %cst_15 {dimension_numbers = #tpu.dot_dimension_numbers<[1], [0], [0], [1], [0, 0, 1, 1], [], []>} : vector<256x3xbf16>, vector<3x32xbf16>, vector<256x32xf32> -> vector<256x32xf32>
    %26 = arith.addf %20, %25 : vector<256x32xf32>
    %27 = vector.extract_strided_slice %1 {offsets = [1, 1, 0], sizes = [16, 16, 3], strides = [1, 1, 1]} : vector<18x18x3xbf16> to vector<16x16x3xbf16>
    %28 = vector.shape_cast %27 : vector<16x16x3xbf16> to vector<256x3xbf16>
    %c4 = arith.constant 4 : index
    %c0_16 = arith.constant 0 : index
    %c0_17 = arith.constant 0 : index
    %29 = vector.load %arg2[%c4, %c0_16, %c0_17] : memref<9x3x32xbf16, #tpu.memory_space<vmem>>, vector<1x3x32xbf16>
    %30 = vector.shape_cast %29 : vector<1x3x32xbf16> to vector<3x32xbf16>
    %cst_18 = arith.constant dense<0.000000e+00> : vector<256x32xf32>
    %31 = tpu.matmul %28, %30, %cst_18 {dimension_numbers = #tpu.dot_dimension_numbers<[1], [0], [0], [1], [0, 0, 1, 1], [], []>} : vector<256x3xbf16>, vector<3x32xbf16>, vector<256x32xf32> -> vector<256x32xf32>
    %32 = arith.addf %26, %31 : vector<256x32xf32>
    %33 = vector.extract_strided_slice %1 {offsets = [1, 2, 0], sizes = [16, 16, 3], strides = [1, 1, 1]} : vector<18x18x3xbf16> to vector<16x16x3xbf16>
    %34 = vector.shape_cast %33 : vector<16x16x3xbf16> to vector<256x3xbf16>
    %c5 = arith.constant 5 : index
    %c0_19 = arith.constant 0 : index
    %c0_20 = arith.constant 0 : index
    %35 = vector.load %arg2[%c5, %c0_19, %c0_20] : memref<9x3x32xbf16, #tpu.memory_space<vmem>>, vector<1x3x32xbf16>
    %36 = vector.shape_cast %35 : vector<1x3x32xbf16> to vector<3x32xbf16>
    %cst_21 = arith.constant dense<0.000000e+00> : vector<256x32xf32>
    %37 = tpu.matmul %34, %36, %cst_21 {dimension_numbers = #tpu.dot_dimension_numbers<[1], [0], [0], [1], [0, 0, 1, 1], [], []>} : vector<256x3xbf16>, vector<3x32xbf16>, vector<256x32xf32> -> vector<256x32xf32>
    %38 = arith.addf %32, %37 : vector<256x32xf32>
    %39 = vector.extract_strided_slice %1 {offsets = [2, 0, 0], sizes = [16, 16, 3], strides = [1, 1, 1]} : vector<18x18x3xbf16> to vector<16x16x3xbf16>
    %40 = vector.shape_cast %39 : vector<16x16x3xbf16> to vector<256x3xbf16>
    %c6 = arith.constant 6 : index
    %c0_22 = arith.constant 0 : index
    %c0_23 = arith.constant 0 : index
    %41 = vector.load %arg2[%c6, %c0_22, %c0_23] : memref<9x3x32xbf16, #tpu.memory_space<vmem>>, vector<1x3x32xbf16>
    %42 = vector.shape_cast %41 : vector<1x3x32xbf16> to vector<3x32xbf16>
    %cst_24 = arith.constant dense<0.000000e+00> : vector<256x32xf32>
    %43 = tpu.matmul %40, %42, %cst_24 {dimension_numbers = #tpu.dot_dimension_numbers<[1], [0], [0], [1], [0, 0, 1, 1], [], []>} : vector<256x3xbf16>, vector<3x32xbf16>, vector<256x32xf32> -> vector<256x32xf32>
    %44 = arith.addf %38, %43 : vector<256x32xf32>
    %45 = vector.extract_strided_slice %1 {offsets = [2, 1, 0], sizes = [16, 16, 3], strides = [1, 1, 1]} : vector<18x18x3xbf16> to vector<16x16x3xbf16>
    %46 = vector.shape_cast %45 : vector<16x16x3xbf16> to vector<256x3xbf16>
    %c7 = arith.constant 7 : index
    %c0_25 = arith.constant 0 : index
    %c0_26 = arith.constant 0 : index
    %47 = vector.load %arg2[%c7, %c0_25, %c0_26] : memref<9x3x32xbf16, #tpu.memory_space<vmem>>, vector<1x3x32xbf16>
    %48 = vector.shape_cast %47 : vector<1x3x32xbf16> to vector<3x32xbf16>
    %cst_27 = arith.constant dense<0.000000e+00> : vector<256x32xf32>
    %49 = tpu.matmul %46, %48, %cst_27 {dimension_numbers = #tpu.dot_dimension_numbers<[1], [0], [0], [1], [0, 0, 1, 1], [], []>} : vector<256x3xbf16>, vector<3x32xbf16>, vector<256x32xf32> -> vector<256x32xf32>
    %50 = arith.addf %44, %49 : vector<256x32xf32>
    %51 = vector.extract_strided_slice %1 {offsets = [2, 2, 0], sizes = [16, 16, 3], strides = [1, 1, 1]} : vector<18x18x3xbf16> to vector<16x16x3xbf16>
    %52 = vector.shape_cast %51 : vector<16x16x3xbf16> to vector<256x3xbf16>
    %c8 = arith.constant 8 : index
    %c0_28 = arith.constant 0 : index
    %c0_29 = arith.constant 0 : index
    %53 = vector.load %arg2[%c8, %c0_28, %c0_29] : memref<9x3x32xbf16, #tpu.memory_space<vmem>>, vector<1x3x32xbf16>
    %54 = vector.shape_cast %53 : vector<1x3x32xbf16> to vector<3x32xbf16>
    %cst_30 = arith.constant dense<0.000000e+00> : vector<256x32xf32>
    %55 = tpu.matmul %52, %54, %cst_30 {dimension_numbers = #tpu.dot_dimension_numbers<[1], [0], [0], [1], [0, 0, 1, 1], [], []>} : vector<256x3xbf16>, vector<3x32xbf16>, vector<256x32xf32> -> vector<256x32xf32>
    %56 = arith.addf %50, %55 : vector<256x32xf32>
    %c0_31 = arith.constant 0 : index
    %c0_32 = arith.constant 0 : index
    %57 = vector.load %arg3[%c0_31, %c0_32] : memref<1x32xf32, #tpu.memory_space<vmem>>, vector<1x32xf32>
    %58 = vector.broadcast %57 : vector<1x32xf32> to vector<256x32xf32>
    %59 = arith.addf %56, %58 : vector<256x32xf32>
    %60 = vector.shape_cast %59 : vector<256x32xf32> to vector<1x16x16x32xf32>
    %c0_33 = arith.constant 0 : index
    %c0_34 = arith.constant 0 : index
    %c0_35 = arith.constant 0 : index
    %c0_36 = arith.constant 0 : index
    %61 = vector.load %arg4[%c0_33, %c0_34, %c0_35, %c0_36] : memref<1x16x16x32xf32, #tpu.memory_space<vmem>>, vector<1x16x16x32xf32>
    tpu.vector_store %arg4[%c0_33, %c0_34, %c0_35, %c0_36], %60 {strides = array<i32>} : memref<1x16x16x32xf32, #tpu.memory_space<vmem>>, vector<1x16x16x32xf32>,
    return
  }
  func.func @transform_0(%arg0: i32) -> (i32, i32, i32, i32) {
    %c0_i32 = arith.constant 0 : i32
    %c0_i32_0 = arith.constant 0 : i32
    %c0_i32_1 = arith.constant 0 : i32
    %c0_i32_2 = arith.constant 0 : i32
    return %arg0, %c0_i32, %c0_i32_0, %c0_i32_1 : i32, i32, i32, i32
  }
  func.func @transform_1(%arg0: i32) -> (i32, i32, i32) {
    %c0_i32 = arith.constant 0 : i32
    %c0_i32_0 = arith.constant 0 : i32
    %c0_i32_1 = arith.constant 0 : i32
    %c0_i32_2 = arith.constant 0 : i32
    return %c0_i32, %c0_i32_0, %c0_i32_1 : i32, i32, i32
  }
  func.func @transform_2(%arg0: i32) -> (i32, i32) {
    %c0_i32 = arith.constant 0 : i32
    %c0_i32_0 = arith.constant 0 : i32
    %c0_i32_1 = arith.constant 0 : i32
    return %c0_i32, %c0_i32_0 : i32, i32
  }
  func.func @transform_3(%arg0: i32) -> (i32, i32, i32, i32) {
    %c0_i32 = arith.constant 0 : i32
    %c0_i32_0 = arith.constant 0 : i32
    %c0_i32_1 = arith.constant 0 : i32
    %c0_i32_2 = arith.constant 0 : i32
    return %arg0, %c0_i32, %c0_i32_0, %c0_i32_1 : i32, i32, i32, i32
  }
}

</mosaic_0001>

<llo_original>
// kernel: pallas_conv3x3.1
$region0: #{pallas_conv3x3.1}
  #allocation0 [shape = 'u32[]', space=smem, size = 0x4, offset = 0x4, fixed_abs, tag = 'smem constant byte address 0x4 - core index']
  #allocation1 [shape = 'u32[144,128]{1,0:T(1,128)}', space=vmem, size = 0x12000, scoped, tag = 'internal scratch']
  %s0 = inlined_call_operand.vmem [shape: bf16[2,18,18,3], index: 0, kind: input, shape index: {}]
  %s1 = inlined_call_operand.vmem [shape: bf16[9,3,32], index: 1, kind: input, shape index: {}]
  %s2 = inlined_call_operand.vmem [shape: f32[1,32], index: 2, kind: input, shape index: {}]
  %s3 = inlined_call_operand.hbm [shape: f32[2,16,16,32], index: 3, kind: output, shape index: {}]
  %s4 = sld [smem:[#allocation0]]
  $region45: #{pallas_conv3x3.1} parent=0
    _
  %s6 = ssub.s32 1, %s4
  %s7 = scalar_select 0, %s6, %s4
  $region1: #{pallas_conv3x3.1} parent=0
    #allocation2 [shape = 'u8[262144]{0}', space=vmem, size = 0x40000, scoped, tag = 'output window, operand 0']
    #allocation3 [shape = 's32[2]{0}', space=sflag, size = 0x8, scoped, tag = 'scoped memory for pallas_conv3x3.1']
    %8 = vsyncpa [#allocation3], 0
    %s9 = scalar_lea.sflag [#allocation3], 1
    %10 = vsyncpa %s9, 0
    loop: start=0, step=1, limit=4
    $region2: #{pallas_conv3x3.1} parent=1 // loop_pre_header
      _
    $region3: #{pallas_conv3x3.1} parent=1 // loop_header
      %s12 = sphi 0, %s16
      %p13 = scmp.ge.s32.totalorder %s12, 4
      %s22 = sphi 0, %s24
      %s25 = sphi 0, %s22
      %s26 = sphi 0, %s25
      %s42 = sphi 0, %s26
      %s46 = sphi 0, %s46
      %s48 = sphi 0, %s46
      %s49 = sphi 0, %s48
      %s63 = sphi 0, %s49
      %s67 = sphi 0, %s67
      %s69 = sphi 0, %s67
      %s70 = sphi 0, %s69
      %s84 = sphi 0, %s70
      %s90 = sphi 0, %s92
      %s93 = sphi 0, %s90
      %s94 = sphi 0, %s93
      %s110 = sphi 0, %s94
    $region4: #{pallas_conv3x3.1} parent=1 // loop_header_branch
      %15 = sbr.rel (%p13) target = $region8
    $region5: #{pallas_conv3x3.1} parent=1 // loop_body
      %s17 = ssub.s32 %s12, 1
      %s18 = ssub.s32 %s12, 2
      %s19 = sadd.s32 %s12, 1
      %s20 = ssub.s32 %s12, %s19
      %p21 = scmp.eq.s32.totalorder %s20, 0
      %s23 = sadd.s32 %s22, 1
      %s24 = scalar_select %p21, %s22, %s23
      %p27 = pneg %p21
      %p28 = scmp.eq.s32.totalorder %s12, 1
      %p29 = por %p27, %p28
      %p30 = scmp.ne.s32.totalorder %s22, %s25
      %p31 = scmp.eq.s32.totalorder %s12, 0
      %p32 = por %p30, %p31
      %p33 = scmp.ne.s32.totalorder %s22, %s25
      %p34 = scmp.eq.s32.totalorder %s17, 1
      %p35 = por %p33, %p34
      %p36 = scmp.ne.s32.totalorder %s25, %s26
      %p37 = scmp.eq.s32.totalorder %s17, 0
      %p38 = por %p36, %p37
      %p39 = scmp.ne.s32.totalorder %s25, %s26
      %p40 = scmp.eq.s32.totalorder %s18, 1
      %p41 = por %p39, %p40
      %p43 = scmp.ne.s32.totalorder %s26, %s42
      %p44 = scmp.eq.s32.totalorder %s18, 0
      %p45 = por %p43, %p44
      %s47 = sadd.s32 %s46, 1
      %p50 = scmp.eq.s32.totalorder %s12, 1
      %p51 = scmp.ne.s32.totalorder %s46, %s48
      %p52 = scmp.eq.s32.totalorder %s12, 0
      %p53 = por %p51, %p52
      %p54 = scmp.ne.s32.totalorder %s46, %s48
      %p55 = scmp.eq.s32.totalorder %s17, 1
      %p56 = por %p54, %p55
      %p57 = scmp.ne.s32.totalorder %s48, %s49
      %p58 = scmp.eq.s32.totalorder %s17, 0
      %p59 = por %p57, %p58
      %p60 = scmp.ne.s32.totalorder %s48, %s49
      %p61 = scmp.eq.s32.totalorder %s18, 1
      %p62 = por %p60, %p61
      %p64 = scmp.ne.s32.totalorder %s49, %s63
      %p65 = scmp.eq.s32.totalorder %s18, 0
      %p66 = por %p64, %p65
      %s68 = sadd.s32 %s67, 1
      %p71 = scmp.eq.s32.totalorder %s12, 1
      %p72 = scmp.ne.s32.totalorder %s67, %s69
      %p73 = scmp.eq.s32.totalorder %s12, 0
      %p74 = por %p72, %p73
      %p75 = scmp.ne.s32.totalorder %s67, %s69
      %p76 = scmp.eq.s32.totalorder %s17, 1
      %p77 = por %p75, %p76
      %p78 = scmp.ne.s32.totalorder %s69, %s70
      %p79 = scmp.eq.s32.totalorder %s17, 0
      %p80 = por %p78, %p79
      %p81 = scmp.ne.s32.totalorder %s69, %s70
      %p82 = scmp.eq.s32.totalorder %s18, 1
      %p83 = por %p81, %p82
      %p85 = scmp.ne.s32.totalorder %s70, %s84
      %p86 = scmp.eq.s32.totalorder %s18, 0
      %p87 = por %p85, %p86
      %s88 = ssub.s32 %s12, %s19
      %p89 = scmp.eq.s32.totalorder %s88, 0
      %s91 = sadd.s32 %s90, 1
      %s92 = scalar_select %p89, %s90, %s91
      %p95 = pneg %p89
      %p96 = scmp.eq.s32.totalorder %s12, 1
      %p97 = por %p95, %p96
      %p98 = scmp.ne.s32.totalorder %s90, %s93
      %p99 = scmp.eq.s32.totalorder %s12, 0
      %p100 = por %p98, %p99
      %p101 = scmp.ne.s32.totalorder %s90, %s93
      %p102 = scmp.eq.s32.totalorder %s17, 1
      %p103 = por %p101, %p102
      %p104 = scmp.ne.s32.totalorder %s93, %s94
      %p105 = scmp.eq.s32.totalorder %s17, 0
      %p106 = por %p104, %p105
      %p107 = scmp.ne.s32.totalorder %s93, %s94
      %p108 = scmp.eq.s32.totalorder %s18, 1
      %p109 = por %p107, %p108
      %p111 = scmp.ne.s32.totalorder %s94, %s110
      %p112 = scmp.eq.s32.totalorder %s18, 0
      %p113 = por %p111, %p112
      %p114 = scmp.le.s32.totalorder 1, %s12
      %p115 = scmp.lt.s32.totalorder %s12, 3
      %p116 = pnand %p114, %p115
      %p117 = pneg %p116
      // Predicated region
      $region9: #{pallas_conv3x3.1} parent=5 // pred_check
        _
      $region10: #{pallas_conv3x3.1} parent=5 // pred_check_branch
        %119 = sbr.rel (%p116) target = $region12
      $region11: #{pallas_conv3x3.1} parent=5 // pred_region
        %s120 = ssub.s32 %s12, 1
        // Predicated region
        $region13: #{pallas_conv3x3.1} parent=11 // pred_check
          %p121 = pneg %p59
        $region14: #{pallas_conv3x3.1} parent=11 // pred_check_branch
          %123 = sbr.rel (%p121) target = $region16
        $region15: #{pallas_conv3x3.1} parent=11 // pred_region
          _
        $region16: #{pallas_conv3x3.1} parent=11 // pred_fallthru
          _
        // Predicated region
        $region17: #{pallas_conv3x3.1} parent=11 // pred_check
          %p124 = pneg %p80
        $region18: #{pallas_conv3x3.1} parent=11 // pred_check_branch
          %126 = sbr.rel (%p124) target = $region20
        $region19: #{pallas_conv3x3.1} parent=11 // pred_region
          _
        $region20: #{pallas_conv3x3.1} parent=11 // pred_fallthru
          _
      $region12: #{pallas_conv3x3.1} parent=5 // pred_fallthru
        _
      %p127 = scmp.lt.s32.totalorder %s12, 2
      // Predicated region
      $region21: #{pallas_conv3x3.1} parent=5 // pred_check
        %p128 = pneg %p127
      $region22: #{pallas_conv3x3.1} parent=5 // pred_check_branch
        %130 = sbr.rel (%p128) target = $region24
      $region23: #{pallas_conv3x3.1} parent=5 // pred_region
        // Predicated region
        $region25: #{pallas_conv3x3.1} parent=23 // pred_check
          %p131 = pneg %p32
        $region26: #{pallas_conv3x3.1} parent=23 // pred_check_branch
          %133 = sbr.rel (%p131) target = $region28
        $region27: #{pallas_conv3x3.1} parent=23 // pred_region
          %p134 = scmp.lt.s32.totalorder %s12, 1
          %s135 = scalar_select %p134, %s12, 1
          %s136 = smul.addr %s135, 54
          %s137 = smul.addr %s136, 4
          %s138 = scalar_lea.vmem %s0, %s137
        $region28: #{pallas_conv3x3.1} parent=23 // pred_fallthru
          _
      $region24: #{pallas_conv3x3.1} parent=5 // pred_fallthru
        _
      %p139 = scmp.le.s32.totalorder 1, %s12
      %p140 = scmp.lt.s32.totalorder %s12, 3
      %p141 = pnand %p139, %p140
      %p142 = pneg %p141
      // Predicated region
      $region29: #{pallas_conv3x3.1} parent=5 // pred_check
        _
      $region30: #{pallas_conv3x3.1} parent=5 // pred_check_branch
        %144 = sbr.rel (%p141) target = $region32
      $region31: #{pallas_conv3x3.1} parent=5 // pred_region
        %s145 = ssub.s32 %s12, 1
        %p146 = scmp.lt.s32.totalorder %s17, 1
        %s147 = scalar_select %p146, %s17, 1
        %s148 = smul.addr %s147, 54
        %s149 = smul.addr %s148, 4
        %s150 = scalar_lea.vmem %s0, %s149
        %p151 = pneg %p38
        %p152 = pneg %p35
        %p153 = pneg %p59
        %p154 = pneg %p56
        %p155 = pneg %p80
        %p156 = pneg %p77
        %p157 = pneg %p106
        %p158 = pneg %p103
        %s159 = sand.u32 %s93, 1
        %s160 = scalar_lea.sflag [#allocation3], %s159
        %s161 = sand.u32 %s93, 1
        %s162 = smul.addr %s161, 256
        %s163 = scalar_lea.vmem [#allocation2], %s162
        %p164 = scmp.lt.s32.totalorder %s17, 1
        %s165 = scalar_select %p164, %s17, 1
        %s166 = smul.addr %s165, 54
        %s167 = smul.addr %s166, 4
        %s168 = scalar_lea.vmem %s0, %s167
        %v170 = vld [vmem:[%s168] sm:$0xf]
        %v171 = vld [vmem:[%s168 + $0x4] sm:$0xf]
        %v172 = vld [vmem:[%s168 + $0x8] sm:$0x1]
        %v173 = vld [vmem:[%s168 + $0xc] sm:$0xf]
        %v174 = vld [vmem:[%s168 + $0x10] sm:$0xf]
        %v175 = vld [vmem:[%s168 + $0x14] sm:$0x1]
        %v176 = vld [vmem:[%s168 + $0x18] sm:$0xf]
        %v177 = vld [vmem:[%s168 + $0x1c] sm:$0xf]
        %v178 = vld [vmem:[%s168 + $0x20] sm:$0x1]
        %v179 = vld [vmem:[%s168 + $0x24] sm:$0xf]
        %v180 = vld [vmem:[%s168 + $0x28] sm:$0xf]
        %v181 = vld [vmem:[%s168 + $0x2c] sm:$0x1]
        %v182 = vld [vmem:[%s168 + $0x30] sm:$0xf]
        %v183 = vld [vmem:[%s168 + $0x34] sm:$0xf]
        %v184 = vld [vmem:[%s168 + $0x38] sm:$0x1]
        %v185 = vld [vmem:[%s168 + $0x3c] sm:$0xf]
        %v186 = vld [vmem:[%s168 + $0x40] sm:$0xf]
        %v187 = vld [vmem:[%s168 + $0x44] sm:$0x1]
        %v188 = vld [vmem:[%s168 + $0x48] sm:$0xf]
        %v189 = vld [vmem:[%s168 + $0x4c] sm:$0xf]
        %v190 = vld [vmem:[%s168 + $0x50] sm:$0x1]
        %v191 = vld [vmem:[%s168 + $0x54] sm:$0xf]
        %v192 = vld [vmem:[%s168 + $0x58] sm:$0xf]
        %v193 = vld [vmem:[%s168 + $0x5c] sm:$0x1]
        %v194 = vld [vmem:[%s168 + $0x60] sm:$0xf]
        %v195 = vld [vmem:[%s168 + $0x64] sm:$0xf]
        %v196 = vld [vmem:[%s168 + $0x68] sm:$0x1]
        %v197 = vld [vmem:[%s168 + $0x6c] sm:$0xf]
        %v198 = vld [vmem:[%s168 + $0x70] sm:$0xf]
        %v199 = vld [vmem:[%s168 + $0x74] sm:$0x1]
        %v200 = vld [vmem:[%s168 + $0x78] sm:$0xf]
        %v201 = vld [vmem:[%s168 + $0x7c] sm:$0xf]
        %v202 = vld [vmem:[%s168 + $0x80] sm:$0x1]
        %v203 = vld [vmem:[%s168 + $0x84] sm:$0xf]
        %v204 = vld [vmem:[%s168 + $0x88] sm:$0xf]
        %v205 = vld [vmem:[%s168 + $0x8c] sm:$0x1]
        %v206 = vld [vmem:[%s168 + $0x90] sm:$0xf]
        %v207 = vld [vmem:[%s168 + $0x94] sm:$0xf]
        %v208 = vld [vmem:[%s168 + $0x98] sm:$0x1]
        %v209 = vld [vmem:[%s168 + $0x9c] sm:$0xf]
        %v210 = vld [vmem:[%s168 + $0xa0] sm:$0xf]
        %v211 = vld [vmem:[%s168 + $0xa4] sm:$0x1]
        %v212 = vld [vmem:[%s168 + $0xa8] sm:$0xf]
        %v213 = vld [vmem:[%s168 + $0xac] sm:$0xf]
        %v214 = vld [vmem:[%s168 + $0xb0] sm:$0x1]
        %v215 = vld [vmem:[%s168 + $0xb4] sm:$0xf]
        %v216 = vld [vmem:[%s168 + $0xb8] sm:$0xf]
        %v217 = vld [vmem:[%s168 + $0xbc] sm:$0x1]
        %v218 = vld [vmem:[%s168 + $0xc0] sm:$0xf]
        %v219 = vld [vmem:[%s168 + $0xc4] sm:$0xf]
        %v220 = vld [vmem:[%s168 + $0xc8] sm:$0x1]
        %v221 = vld [vmem:[%s168 + $0xcc] sm:$0xf]
        %v222 = vld [vmem:[%s168 + $0xd0] sm:$0xf]
        %v223 = vld [vmem:[%s168 + $0xd4] sm:$0x1]
        %v224 = vld [vmem:[%s1] sm:$0x3]
        %vm225 = vsmask.f32 3328
        %vm226 = vsmask.f32 7440
        %vm227 = vmor %vm225, %vm226
        %v229 = vshrl.u32 %v170, 16
        %v231 = vrot.slane %v229, 4
        %v232 = vshll.u32 %v170, 16
        %v234 = vrot.slane %v232, 5
        %v235 = vor.u32 %v231, %v234
        %v236 = vrot.slane %v235, 4
        %v238 = vshll.u32 %v171, 16
        %v240 = vrot.slane %v238, 5
        %v241 = vsel %vm227, %v236, %v240
        %v242 = vshrl.u32 %v171, 16
        %v244 = vrot.slane %v242, 4
        %v245 = vor.u32 %v244, %v240
        %v246 = vrot.slane %v245, 4
        %v248 = vshll.u32 %v172, 16
        %v250 = vrot.slane %v248, 5
        %v251 = vsel %vm227, %v246, %v250
        %v253 = vshrl.u32 %v173, 16
        %v255 = vrot.slane %v253, 4
        %v256 = vshll.u32 %v173, 16
        %v258 = vrot.slane %v256, 5
        %v259 = vor.u32 %v255, %v258
        %v260 = vrot.slane %v259, 4
        %v262 = vshll.u32 %v174, 16
        %v264 = vrot.slane %v262, 5
        %v265 = vsel %vm227, %v260, %v264
        %v266 = vshrl.u32 %v174, 16
        %v268 = vrot.slane %v266, 4
        %v269 = vor.u32 %v268, %v264
        %v270 = vrot.slane %v269, 4
        %v272 = vshll.u32 %v175, 16
        %v274 = vrot.slane %v272, 5
        %v275 = vsel %vm227, %v270, %v274
        %v277 = vshrl.u32 %v176, 16
        %v279 = vrot.slane %v277, 4
        %v280 = vshll.u32 %v176, 16
        %v282 = vrot.slane %v280, 5
        %v283 = vor.u32 %v279, %v282
        %v284 = vrot.slane %v283, 4
        %v286 = vshll.u32 %v177, 16
        %v288 = vrot.slane %v286, 5
        %v289 = vsel %vm227, %v284, %v288
        %v290 = vshrl.u32 %v177, 16
        %v292 = vrot.slane %v290, 4
        %v293 = vor.u32 %v292, %v288
        %v294 = vrot.slane %v293, 4
        %v296 = vshll.u32 %v178, 16
        %v298 = vrot.slane %v296, 5
        %v299 = vsel %vm227, %v294, %v298
        %v301 = vshrl.u32 %v179, 16
        %v303 = vrot.slane %v301, 4
        %v304 = vshll.u32 %v179, 16
        %v306 = vrot.slane %v304, 5
        %v307 = vor.u32 %v303, %v306
        %v308 = vrot.slane %v307, 4
        %v310 = vshll.u32 %v180, 16
        %v312 = vrot.slane %v310, 5
        %v313 = vsel %vm227, %v308, %v312
        %v314 = vshrl.u32 %v180, 16
        %v316 = vrot.slane %v314, 4
        %v317 = vor.u32 %v316, %v312
        %v318 = vrot.slane %v317, 4
        %v320 = vshll.u32 %v181, 16
        %v322 = vrot.slane %v320, 5
        %v323 = vsel %vm227, %v318, %v322
        %v325 = vshrl.u32 %v182, 16
        %v327 = vrot.slane %v325, 4
        %v328 = vshll.u32 %v182, 16
        %v330 = vrot.slane %v328, 5
        %v331 = vor.u32 %v327, %v330
        %v332 = vrot.slane %v331, 4
        %v334 = vshll.u32 %v183, 16
        %v336 = vrot.slane %v334, 5
        %v337 = vsel %vm227, %v332, %v336
        %v338 = vshrl.u32 %v183, 16
        %v340 = vrot.slane %v338, 4
        %v341 = vor.u32 %v340, %v336
        %v342 = vrot.slane %v341, 4
        %v344 = vshll.u32 %v184, 16
        %v346 = vrot.slane %v344, 5
        %v347 = vsel %vm227, %v342, %v346
        %v349 = vshrl.u32 %v185, 16
        %v351 = vrot.slane %v349, 4
        %v352 = vshll.u32 %v185, 16
        %v354 = vrot.slane %v352, 5
        %v355 = vor.u32 %v351, %v354
        %v356 = vrot.slane %v355, 4
        %v358 = vshll.u32 %v186, 16
        %v360 = vrot.slane %v358, 5
        %v361 = vsel %vm227, %v356, %v360
        %v362 = vshrl.u32 %v186, 16
        %v364 = vrot.slane %v362, 4
        %v365 = vor.u32 %v364, %v360
        %v366 = vrot.slane %v365, 4
        %v368 = vshll.u32 %v187, 16
        %v370 = vrot.slane %v368, 5
        %v371 = vsel %vm227, %v366, %v370
        %v373 = vshrl.u32 %v188, 16
        %v375 = vrot.slane %v373, 4
        %v376 = vshll.u32 %v188, 16
        %v378 = vrot.slane %v376, 5
        %v379 = vor.u32 %v375, %v378
        %v380 = vrot.slane %v379, 4
        %v382 = vshll.u32 %v189, 16
        %v384 = vrot.slane %v382, 5
        %v385 = vsel %vm227, %v380, %v384
        %v386 = vshrl.u32 %v189, 16
        %v388 = vrot.slane %v386, 4
        %v389 = vor.u32 %v388, %v384
        %v390 = vrot.slane %v389, 4
        %v392 = vshll.u32 %v190, 16
        %v394 = vrot.slane %v392, 5
        %v395 = vsel %vm227, %v390, %v394
        %v397 = vshrl.u32 %v191, 16
        %v399 = vrot.slane %v397, 4
        %v400 = vshll.u32 %v191, 16
        %v402 = vrot.slane %v400, 5
        %v403 = vor.u32 %v399, %v402
        %v404 = vrot.slane %v403, 4
        %v406 = vshll.u32 %v192, 16
        %v408 = vrot.slane %v406, 5
        %v409 = vsel %vm227, %v404, %v408
        %v410 = vshrl.u32 %v192, 16
        %v412 = vrot.slane %v410, 4
        %v413 = vor.u32 %v412, %v408
        %v414 = vrot.slane %v413, 4
        %v416 = vshll.u32 %v193, 16
        %v418 = vrot.slane %v416, 5
        %v419 = vsel %vm227, %v414, %v418
        %v421 = vshrl.u32 %v194, 16
        %v423 = vrot.slane %v421, 4
        %v424 = vshll.u32 %v194, 16
        %v426 = vrot.slane %v424, 5
        %v427 = vor.u32 %v423, %v426
        %v428 = vrot.slane %v427, 4
        %v430 = vshll.u32 %v195, 16
        %v432 = vrot.slane %v430, 5
        %v433 = vsel %vm227, %v428, %v432
        %v434 = vshrl.u32 %v195, 16
        %v436 = vrot.slane %v434, 4
        %v437 = vor.u32 %v436, %v432
        %v438 = vrot.slane %v437, 4
        %v440 = vshll.u32 %v196, 16
        %v442 = vrot.slane %v440, 5
        %v443 = vsel %vm227, %v438, %v442
        %v445 = vshrl.u32 %v197, 16
        %v447 = vrot.slane %v445, 4
        %v448 = vshll.u32 %v197, 16
        %v450 = vrot.slane %v448, 5
        %v451 = vor.u32 %v447, %v450
        %v452 = vrot.slane %v451, 4
        %v454 = vshll.u32 %v198, 16
        %v456 = vrot.slane %v454, 5
        %v457 = vsel %vm227, %v452, %v456
        %v458 = vshrl.u32 %v198, 16
        %v460 = vrot.slane %v458, 4
        %v461 = vor.u32 %v460, %v456
        %v462 = vrot.slane %v461, 4
        %v464 = vshll.u32 %v199, 16
        %v466 = vrot.slane %v464, 5
        %v467 = vsel %vm227, %v462, %v466
        %v469 = vshrl.u32 %v200, 16
        %v471 = vrot.slane %v469, 4
        %v472 = vshll.u32 %v200, 16
        %v474 = vrot.slane %v472, 5
        %v475 = vor.u32 %v471, %v474
        %v476 = vrot.slane %v475, 4
        %v478 = vshll.u32 %v201, 16
        %v480 = vrot.slane %v478, 5
        %v481 = vsel %vm227, %v476, %v480
        %v482 = vshrl.u32 %v201, 16
        %v484 = vrot.slane %v482, 4
        %v485 = vor.u32 %v484, %v480
        %v486 = vrot.slane %v485, 4
        %v488 = vshll.u32 %v202, 16
        %v490 = vrot.slane %v488, 5
        %v491 = vsel %vm227, %v486, %v490
        %v493 = vshrl.u32 %v203, 16
        %v495 = vrot.slane %v493, 4
        %v496 = vshll.u32 %v203, 16
        %v498 = vrot.slane %v496, 5
        %v499 = vor.u32 %v495, %v498
        %v500 = vrot.slane %v499, 4
        %v502 = vshll.u32 %v204, 16
        %v504 = vrot.slane %v502, 5
        %v505 = vsel %vm227, %v500, %v504
        %v506 = vshrl.u32 %v204, 16
        %v508 = vrot.slane %v506, 4
        %v509 = vor.u32 %v508, %v504
        %v510 = vrot.slane %v509, 4
        %v512 = vshll.u32 %v205, 16
        %v514 = vrot.slane %v512, 5
        %v515 = vsel %vm227, %v510, %v514
        %v517 = vshrl.u32 %v206, 16
        %v519 = vrot.slane %v517, 4
        %v520 = vshll.u32 %v206, 16
        %v522 = vrot.slane %v520, 5
        %v523 = vor.u32 %v519, %v522
        %v524 = vrot.slane %v523, 4
        %v526 = vshll.u32 %v207, 16
        %v528 = vrot.slane %v526, 5
        %v529 = vsel %vm227, %v524, %v528
        %v530 = vshrl.u32 %v207, 16
        %v532 = vrot.slane %v530, 4
        %v533 = vor.u32 %v532, %v528
        %v534 = vrot.slane %v533, 4
        %v536 = vshll.u32 %v208, 16
        %v538 = vrot.slane %v536, 5
        %v539 = vsel %vm227, %v534, %v538
        %v541 = vshrl.u32 %v209, 16
        %v543 = vrot.slane %v541, 4
        %v544 = vshll.u32 %v209, 16
        %v546 = vrot.slane %v544, 5
        %v547 = vor.u32 %v543, %v546
        %v548 = vrot.slane %v547, 4
        %v550 = vshll.u32 %v210, 16
        %v552 = vrot.slane %v550, 5
        %v553 = vsel %vm227, %v548, %v552
        %v554 = vshrl.u32 %v210, 16
        %v556 = vrot.slane %v554, 4
        %v557 = vor.u32 %v556, %v552
        %v558 = vrot.slane %v557, 4
        %v560 = vshll.u32 %v211, 16
        %v562 = vrot.slane %v560, 5
        %v563 = vsel %vm227, %v558, %v562
        %v565 = vshrl.u32 %v212, 16
        %v567 = vrot.slane %v565, 4
        %v568 = vshll.u32 %v212, 16
        %v570 = vrot.slane %v568, 5
        %v571 = vor.u32 %v567, %v570
        %v572 = vrot.slane %v571, 4
        %v574 = vshll.u32 %v213, 16
        %v576 = vrot.slane %v574, 5
        %v577 = vsel %vm227, %v572, %v576
        %v578 = vshrl.u32 %v213, 16
        %v580 = vrot.slane %v578, 4
        %v581 = vor.u32 %v580, %v576
        %v582 = vrot.slane %v581, 4
        %v584 = vshll.u32 %v214, 16
        %v586 = vrot.slane %v584, 5
        %v587 = vsel %vm227, %v582, %v586
        %v589 = vshrl.u32 %v215, 16
        %v591 = vrot.slane %v589, 4
        %v592 = vshll.u32 %v215, 16
        %v594 = vrot.slane %v592, 5
        %v595 = vor.u32 %v591, %v594
        %v596 = vrot.slane %v595, 4
        %v598 = vshll.u32 %v216, 16
        %v600 = vrot.slane %v598, 5
        %v601 = vsel %vm227, %v596, %v600
        %v602 = vshrl.u32 %v216, 16
        %v604 = vrot.slane %v602, 4
        %v605 = vor.u32 %v604, %v600
        %v606 = vrot.slane %v605, 4
        %v608 = vshll.u32 %v217, 16
        %v610 = vrot.slane %v608, 5
        %v611 = vsel %vm227, %v606, %v610
        %s612 = scalar_lea.vmem %s1, 2
        %v613 = vld [vmem:[%s612] sm:$0x3]
        %v614 = vunpack.c.l.b16 %v241
        %v615 = vunpack.c.l.b16 %v251
        %v616 = vunpack.c.l.b16 %v265
        %v617 = vunpack.c.l.b16 %v275
        %v618 = vunpack.c.l.b16 %v289
        %v619 = vunpack.c.l.b16 %v299
        %v620 = vunpack.c.l.b16 %v313
        %v621 = vunpack.c.l.b16 %v323
        %v622 = vunpack.c.l.b16 %v337
        %v623 = vunpack.c.l.b16 %v347
        %v624 = vunpack.c.l.b16 %v361
        %v625 = vunpack.c.l.b16 %v371
        %v626 = vunpack.c.l.b16 %v385
        %v627 = vunpack.c.l.b16 %v395
        %v628 = vunpack.c.l.b16 %v409
        %v629 = vunpack.c.l.b16 %v419
        %v630 = vunpack.c.l.b16 %v433
        %v631 = vunpack.c.l.b16 %v443
        %v632 = vunpack.c.l.b16 %v457
        %v633 = vunpack.c.l.b16 %v467
        %v634 = vunpack.c.l.b16 %v481
        %v635 = vunpack.c.l.b16 %v491
        %v636 = vunpack.c.l.b16 %v505
        %v637 = vunpack.c.l.b16 %v515
        %v638 = vunpack.c.l.b16 %v529
        %v639 = vunpack.c.l.b16 %v539
        %v640 = vunpack.c.l.b16 %v553
        %v641 = vunpack.c.l.b16 %v563
        %v642 = vunpack.c.l.b16 %v577
        %v643 = vunpack.c.l.b16 %v587
        %v644 = vunpack.c.l.b16 %v601
        %v645 = vunpack.c.l.b16 %v611
        %v646 = vpack.c.b16 %v615, %v614
        %v647 = vpack.c.b16 %v617, %v616
        %v648 = vpack.c.b16 %v619, %v618
        %v649 = vpack.c.b16 %v621, %v620
        %v650 = vpack.c.b16 %v623, %v622
        %v651 = vpack.c.b16 %v625, %v624
        %v652 = vpack.c.b16 %v627, %v626
        %v653 = vpack.c.b16 %v629, %v628
        %v654 = vpack.c.b16 %v631, %v630
        %v655 = vpack.c.b16 %v633, %v632
        %v656 = vpack.c.b16 %v635, %v634
        %v657 = vpack.c.b16 %v637, %v636
        %v658 = vpack.c.b16 %v639, %v638
        %v659 = vpack.c.b16 %v641, %v640
        %v660 = vpack.c.b16 %v643, %v642
        %v661 = vpack.c.b16 %v645, %v644
        %vm662 = vcmask 23552
        %v664 = vsel %vm662, %v646, 0
        %v667 = vsel %vm662, %v647, 0
        %v670 = vsel %vm662, %v648, 0
        %v673 = vsel %vm662, %v649, 0
        %v676 = vsel %vm662, %v650, 0
        %v679 = vsel %vm662, %v651, 0
        %v682 = vsel %vm662, %v652, 0
        %v685 = vsel %vm662, %v653, 0
        %v688 = vsel %vm662, %v654, 0
        %v691 = vsel %vm662, %v655, 0
        %v694 = vsel %vm662, %v656, 0
        %v697 = vsel %vm662, %v657, 0
        %v700 = vsel %vm662, %v658, 0
        %v703 = vsel %vm662, %v659, 0
        %v706 = vsel %vm662, %v660, 0
        %v709 = vsel %vm662, %v661, 0
        %vm711 = vcmask 1040384
        %vm712 = vcmask 1041408
        %v713 = vsel %vm711, 4294967295, 65535
        %v714 = vsel %vm712, %v713, 0
        %v716 = vand.u32 %v613, %v714
        %718 = vmatprep.subr.bf16.mxu0 0
        %719 = vmatpush1.bf16.msra.mxu0 %v716
        %720 = vmatprep.subr.bf16.mxu0 0
        %721 = vmatpush1.bf16.msra.mxu0 0
        %722 = vmatprep.subr.bf16.mxu0 0
        %723 = vmatpush1.bf16.msra.mxu0 0
        %724 = vmatprep.subr.bf16.mxu0 0
        %725 = vmatpush1.bf16.msra.mxu0 0
        %726 = vmatprep.subr.bf16.mxu0 0
        %727 = vmatpush1.bf16.msra.mxu0 0
        %728 = vmatprep.subr.bf16.mxu0 0
        %729 = vmatpush1.bf16.msra.mxu0 0
        %730 = vmatprep.subr.bf16.mxu0 0
        %731 = vmatpush1.bf16.msra.mxu0 0
        %732 = vmatprep.subr.bf16.mxu0 0
        %733 = vmatpush1.bf16.msra.mxu0 0
        %734 = vmatprep.subr.bf16.mxu0 0
        %735 = vmatpush1.bf16.msra.mxu0 0
        %736 = vmatprep.subr.bf16.mxu0 0
        %737 = vmatpush1.bf16.msra.mxu0 0
        %738 = vmatprep.subr.bf16.mxu0 0
        %739 = vmatpush1.bf16.msra.mxu0 0
        %740 = vmatprep.subr.bf16.mxu0 0
        %741 = vmatpush1.bf16.msra.mxu0 0
        %742 = vmatprep.subr.bf16.mxu0 0
        %743 = vmatpush1.bf16.msra.mxu0 0
        %744 = vmatprep.subr.bf16.mxu0 0
        %745 = vmatpush1.bf16.msra.mxu0 0
        %746 = vmatprep.subr.bf16.mxu0 0
        %747 = vmatpush1.bf16.msra.mxu0 0
        %748 = vmatprep.subr.bf16.mxu0 0
        %749 = vmatpush1.bf16.msra.mxu0 0
        %750 = vmatprep.mubr.bf16.mxu0 0
        %751 = vmatmul.mubr.bf16.gmra.mrb[0].mxu0 %v664
        %v752 = vpop.f32.mrb[0].mxu0
        %v753 = vadd.f32 0.0, %v752
        %v754 = vpop.f32.mrb[0].mxu0
        %v755 = vpop.f32.mrb[0].mxu0
        %v756 = vadd.f32 0.0, %v755
        %v757 = vpop.f32.mrb[0].mxu0
        %758 = vmatprep.mubr.bf16.mxu0 0
        %759 = vmatmul.mubr.bf16.gmra.mrb[0].mxu0 %v667
        %v760 = vpop.f32.mrb[0].mxu0
        %v761 = vadd.f32 0.0, %v760
        %v762 = vpop.f32.mrb[0].mxu0
        %v763 = vpop.f32.mrb[0].mxu0
        %v764 = vadd.f32 0.0, %v763
        %v765 = vpop.f32.mrb[0].mxu0
        %766 = vmatprep.mubr.bf16.mxu0 0
        %767 = vmatmul.mubr.bf16.gmra.mrb[0].mxu0 %v670
        %v768 = vpop.f32.mrb[0].mxu0
        %v769 = vadd.f32 0.0, %v768
        %v770 = vpop.f32.mrb[0].mxu0
        %v771 = vpop.f32.mrb[0].mxu0
        %v772 = vadd.f32 0.0, %v771
        %v773 = vpop.f32.mrb[0].mxu0
        %774 = vmatprep.mubr.bf16.mxu0 0
        %775 = vmatmul.mubr.bf16.gmra.mrb[0].mxu0 %v673
        %v776 = vpop.f32.mrb[0].mxu0
        %v777 = vadd.f32 0.0, %v776
        %v778 = vpop.f32.mrb[0].mxu0
        %v779 = vpop.f32.mrb[0].mxu0
        %v780 = vadd.f32 0.0, %v779
        %v781 = vpop.f32.mrb[0].mxu0
        %782 = vmatprep.mubr.bf16.mxu0 0
        %783 = vmatmul.mubr.bf16.gmra.mrb[0].mxu0 %v676
        %v784 = vpop.f32.mrb[0].mxu0
        %v785 = vadd.f32 0.0, %v784
        %v786 = vpop.f32.mrb[0].mxu0
        %v787 = vpop.f32.mrb[0].mxu0
        %v788 = vadd.f32 0.0, %v787
        %v789 = vpop.f32.mrb[0].mxu0
        %790 = vmatprep.mubr.bf16.mxu0 0
        %791 = vmatmul.mubr.bf16.gmra.mrb[0].mxu0 %v679
        %v792 = vpop.f32.mrb[0].mxu0
        %v793 = vadd.f32 0.0, %v792
        %v794 = vpop.f32.mrb[0].mxu0
        %v795 = vpop.f32.mrb[0].mxu0
        %v796 = vadd.f32 0.0, %v795
        %v797 = vpop.f32.mrb[0].mxu0
        %798 = vmatprep.mubr.bf16.mxu0 0
        %799 = vmatmul.mubr.bf16.gmra.mrb[0].mxu0 %v682
        %v800 = vpop.f32.mrb[0].mxu0
        %v801 = vadd.f32 0.0, %v800
        %v802 = vpop.f32.mrb[0].mxu0
        %v803 = vpop.f32.mrb[0].mxu0
        %v804 = vadd.f32 0.0, %v803
        %v805 = vpop.f32.mrb[0].mxu0
        %806 = vmatprep.mubr.bf16.mxu0 0
        %807 = vmatmul.mubr.bf16.gmra.mrb[0].mxu0 %v685
        %v808 = vpop.f32.mrb[0].mxu0
        %v809 = vadd.f32 0.0, %v808
        %v810 = vpop.f32.mrb[0].mxu0
        %v811 = vpop.f32.mrb[0].mxu0
        %v812 = vadd.f32 0.0, %v811
        %v813 = vpop.f32.mrb[0].mxu0
        %814 = vmatprep.mubr.bf16.mxu0 0
        %815 = vmatmul.mubr.bf16.gmra.mrb[0].mxu0 %v688
        %v816 = vpop.f32.mrb[0].mxu0
        %v817 = vadd.f32 0.0, %v816
        %v818 = vpop.f32.mrb[0].mxu0
        %v819 = vpop.f32.mrb[0].mxu0
        %v820 = vadd.f32 0.0, %v819
        %v821 = vpop.f32.mrb[0].mxu0
        %822 = vmatprep.mubr.bf16.mxu0 0
        %823 = vmatmul.mubr.bf16.gmra.mrb[0].mxu0 %v691
        %v824 = vpop.f32.mrb[0].mxu0
        %v825 = vadd.f32 0.0, %v824
        %v826 = vpop.f32.mrb[0].mxu0
        %v827 = vpop.f32.mrb[0].mxu0
        %v828 = vadd.f32 0.0, %v827
        %v829 = vpop.f32.mrb[0].mxu0
        %830 = vmatprep.mubr.bf16.mxu0 0
        %831 = vmatmul.mubr.bf16.gmra.mrb[0].mxu0 %v694
        %v832 = vpop.f32.mrb[0].mxu0
        %v833 = vadd.f32 0.0, %v832
        %v834 = vpop.f32.mrb[0].mxu0
        %v835 = vpop.f32.mrb[0].mxu0
        %v836 = vadd.f32 0.0, %v835
        %v837 = vpop.f32.mrb[0].mxu0
        %838 = vmatprep.mubr.bf16.mxu0 0
        %839 = vmatmul.mubr.bf16.gmra.mrb[0].mxu0 %v697
        %v840 = vpop.f32.mrb[0].mxu0
        %v841 = vadd.f32 0.0, %v840
        %v842 = vpop.f32.mrb[0].mxu0
        %v843 = vpop.f32.mrb[0].mxu0
        %v844 = vadd.f32 0.0, %v843
        %v845 = vpop.f32.mrb[0].mxu0
        %846 = vmatprep.mubr.bf16.mxu0 0
        %847 = vmatmul.mubr.bf16.gmra.mrb[0].mxu0 %v700
        %v848 = vpop.f32.mrb[0].mxu0
        %v849 = vadd.f32 0.0, %v848
        %v850 = vpop.f32.mrb[0].mxu0
        %v851 = vpop.f32.mrb[0].mxu0
        %v852 = vadd.f32 0.0, %v851
        %v853 = vpop.f32.mrb[0].mxu0
        %854 = vmatprep.mubr.bf16.mxu0 0
        %855 = vmatmul.mubr.bf16.gmra.mrb[0].mxu0 %v703
        %v856 = vpop.f32.mrb[0].mxu0
        %v857 = vadd.f32 0.0, %v856
        %v858 = vpop.f32.mrb[0].mxu0
        %v859 = vpop.f32.mrb[0].mxu0
        %v860 = vadd.f32 0.0, %v859
        %v861 = vpop.f32.mrb[0].mxu0
        %862 = vmatprep.mubr.bf16.mxu0 0
        %863 = vmatmul.mubr.bf16.gmra.mrb[0].mxu0 %v706
        %v864 = vpop.f32.mrb[0].mxu0
        %v865 = vadd.f32 0.0, %v864
        %v866 = vpop.f32.mrb[0].mxu0
        %v867 = vpop.f32.mrb[0].mxu0
        %v868 = vadd.f32 0.0, %v867
        %v869 = vpop.f32.mrb[0].mxu0
        %870 = vmatprep.mubr.bf16.mxu0 0
        %871 = vmatmul.mubr.bf16.gmra.mrb[0].mxu0 %v709
        %v872 = vpop.f32.mrb[0].mxu0
        %v873 = vadd.f32 0.0, %v872
        %v874 = vpop.f32.mrb[0].mxu0
        %v875 = vpop.f32.mrb[0].mxu0
        %v876 = vadd.f32 0.0, %v875
        %v877 = vpop.f32.mrb[0].mxu0
        %878 = vdwg.mxu0
        %v911 = vunpack.c.l.b16 %v170
        %v912 = vunpack.c.l.b16 %v171
        %v913 = vunpack.c.l.b16 %v173
        %v914 = vunpack.c.l.b16 %v174
        %v915 = vunpack.c.l.b16 %v176
        %v916 = vunpack.c.l.b16 %v177
        %v917 = vunpack.c.l.b16 %v179
        %v918 = vunpack.c.l.b16 %v180
        %v919 = vunpack.c.l.b16 %v182
        %v920 = vunpack.c.l.b16 %v183
        %v921 = vunpack.c.l.b16 %v185
        %v922 = vunpack.c.l.b16 %v186
        %v923 = vunpack.c.l.b16 %v188
        %v924 = vunpack.c.l.b16 %v189
        %v925 = vunpack.c.l.b16 %v191
        %v926 = vunpack.c.l.b16 %v192
        %v927 = vunpack.c.l.b16 %v194
        %v928 = vunpack.c.l.b16 %v195
        %v929 = vunpack.c.l.b16 %v197
        %v930 = vunpack.c.l.b16 %v198
        %v931 = vunpack.c.l.b16 %v200
        %v932 = vunpack.c.l.b16 %v201
        %v933 = vunpack.c.l.b16 %v203
        %v934 = vunpack.c.l.b16 %v204
        %v935 = vunpack.c.l.b16 %v206
        %v936 = vunpack.c.l.b16 %v207
        %v937 = vunpack.c.l.b16 %v209
        %v938 = vunpack.c.l.b16 %v210
        %v939 = vunpack.c.l.b16 %v212
        %v940 = vunpack.c.l.b16 %v213
        %v941 = vunpack.c.l.b16 %v215
        %v942 = vunpack.c.l.b16 %v216
        %v943 = vpack.c.b16 %v912, %v911
        %v944 = vpack.c.b16 %v914, %v913
        %v945 = vpack.c.b16 %v916, %v915
        %v946 = vpack.c.b16 %v918, %v917
        %v947 = vpack.c.b16 %v920, %v919
        %v948 = vpack.c.b16 %v922, %v921
        %v949 = vpack.c.b16 %v924, %v923
        %v950 = vpack.c.b16 %v926, %v925
        %v951 = vpack.c.b16 %v928, %v927
        %v952 = vpack.c.b16 %v930, %v929
        %v953 = vpack.c.b16 %v932, %v931
        %v954 = vpack.c.b16 %v934, %v933
        %v955 = vpack.c.b16 %v936, %v935
        %v956 = vpack.c.b16 %v938, %v937
        %v957 = vpack.c.b16 %v940, %v939
        %v958 = vpack.c.b16 %v942, %v941
        %v960 = vsel %vm662, %v943, 0
        %v963 = vsel %vm662, %v944, 0
        %v966 = vsel %vm662, %v945, 0
        %v969 = vsel %vm662, %v946, 0
        %v972 = vsel %vm662, %v947, 0
        %v975 = vsel %vm662, %v948, 0
        %v978 = vsel %vm662, %v949, 0
        %v981 = vsel %vm662, %v950, 0
        %v984 = vsel %vm662, %v951, 0
        %v987 = vsel %vm662, %v952, 0
        %v990 = vsel %vm662, %v953, 0
        %v993 = vsel %vm662, %v954, 0
        %v996 = vsel %vm662, %v955, 0
        %v999 = vsel %vm662, %v956, 0
        %v1002 = vsel %vm662, %v957, 0
        %v1005 = vsel %vm662, %v958, 0
        %v1008 = vand.u32 %v224, %v714
        %1010 = vmatprep.subr.bf16.mxu0 0
        %1011 = vmatpush1.bf16.msra.mxu0 %v1008
        %1012 = vmatprep.subr.bf16.mxu0 0
        %1013 = vmatpush1.bf16.msra.mxu0 0
        %1014 = vmatprep.subr.bf16.mxu0 0
        %1015 = vmatpush1.bf16.msra.mxu0 0
        %1016 = vmatprep.subr.bf16.mxu0 0
        %1017 = vmatpush1.bf16.msra.mxu0 0
        %1018 = vmatprep.subr.bf16.mxu0 0
        %1019 = vmatpush1.bf16.msra.mxu0 0
        %1020 = vmatprep.subr.bf16.mxu0 0
        %1021 = vmatpush1.bf16.msra.mxu0 0
        %1022 = vmatprep.subr.bf16.mxu0 0
        %1023 = vmatpush1.bf16.msra.mxu0 0
        %1024 = vmatprep.subr.bf16.mxu0 0
        %1025 = vmatpush1.bf16.msra.mxu0 0
        %1026 = vmatprep.subr.bf16.mxu0 0
        %1027 = vmatpush1.bf16.msra.mxu0 0
        %1028 = vmatprep.subr.bf16.mxu0 0
        %1029 = vmatpush1.bf16.msra.mxu0 0
        %1030 = vmatprep.subr.bf16.mxu0 0
        %1031 = vmatpush1.bf16.msra.mxu0 0
        %1032 = vmatprep.subr.bf16.mxu0 0
        %1033 = vmatpush1.bf16.msra.mxu0 0
        %1034 = vmatprep.subr.bf16.mxu0 0
        %1035 = vmatpush1.bf16.msra.mxu0 0
        %1036 = vmatprep.subr.bf16.mxu0 0
        %1037 = vmatpush1.bf16.msra.mxu0 0
        %1038 = vmatprep.subr.bf16.mxu0 0
        %1039 = vmatpush1.bf16.msra.mxu0 0
        %1040 = vmatprep.subr.bf16.mxu0 0
        %1041 = vmatpush1.bf16.msra.mxu0 0
        %1042 = vmatprep.mubr.bf16.mxu0 0
        %1043 = vmatmul.mubr.bf16.gmra.mrb[0].mxu0 %v960
        %v1044 = vpop.f32.mrb[0].mxu0
        %v1045 = vadd.f32 %v753, %v1044
        %v1046 = vpop.f32.mrb[0].mxu0
        %v1047 = vpop.f32.mrb[0].mxu0
        %v1048 = vadd.f32 %v756, %v1047
        %v1049 = vpop.f32.mrb[0].mxu0
        %1050 = vmatprep.mubr.bf16.mxu0 0
        %1051 = vmatmul.mubr.bf16.gmra.mrb[0].mxu0 %v963
        %v1052 = vpop.f32.mrb[0].mxu0
        %v1053 = vadd.f32 %v761, %v1052
        %v1054 = vpop.f32.mrb[0].mxu0
        %v1055 = vpop.f32.mrb[0].mxu0
        %v1056 = vadd.f32 %v764, %v1055
        %v1057 = vpop.f32.mrb[0].mxu0
        %1058 = vmatprep.mubr.bf16.mxu0 0
        %1059 = vmatmul.mubr.bf16.gmra.mrb[0].mxu0 %v966
        %v1060 = vpop.f32.mrb[0].mxu0
        %v1061 = vadd.f32 %v769, %v1060
        %v1062 = vpop.f32.mrb[0].mxu0
        %v1063 = vpop.f32.mrb[0].mxu0
        %v1064 = vadd.f32 %v772, %v1063
        %v1065 = vpop.f32.mrb[0].mxu0
        %1066 = vmatprep.mubr.bf16.mxu0 0
        %1067 = vmatmul.mubr.bf16.gmra.mrb[0].mxu0 %v969
        %v1068 = vpop.f32.mrb[0].mxu0
        %v1069 = vadd.f32 %v777, %v1068
        %v1070 = vpop.f32.mrb[0].mxu0
        %v1071 = vpop.f32.mrb[0].mxu0
        %v1072 = vadd.f32 %v780, %v1071
        %v1073 = vpop.f32.mrb[0].mxu0
        %1074 = vmatprep.mubr.bf16.mxu0 0
        %1075 = vmatmul.mubr.bf16.gmra.mrb[0].mxu0 %v972
        %v1076 = vpop.f32.mrb[0].mxu0
        %v1077 = vadd.f32 %v785, %v1076
        %v1078 = vpop.f32.mrb[0].mxu0
        %v1079 = vpop.f32.mrb[0].mxu0
        %v1080 = vadd.f32 %v788, %v1079
        %v1081 = vpop.f32.mrb[0].mxu0
        %1082 = vmatprep.mubr.bf16.mxu0 0
        %1083 = vmatmul.mubr.bf16.gmra.mrb[0].mxu0 %v975
        %v1084 = vpop.f32.mrb[0].mxu0
        %v1085 = vadd.f32 %v793, %v1084
        %v1086 = vpop.f32.mrb[0].mxu0
        %v1087 = vpop.f32.mrb[0].mxu0
        %v1088 = vadd.f32 %v796, %v1087
        %v1089 = vpop.f32.mrb[0].mxu0
        %1090 = vmatprep.mubr.bf16.mxu0 0
        %1091 = vmatmul.mubr.bf16.gmra.mrb[0].mxu0 %v978
        %v1092 = vpop.f32.mrb[0].mxu0
        %v1093 = vadd.f32 %v801, %v1092
        %v1094 = vpop.f32.mrb[0].mxu0
        %v1095 = vpop.f32.mrb[0].mxu0
        %v1096 = vadd.f32 %v804, %v1095
        %v1097 = vpop.f32.mrb[0].mxu0
        %1098 = vmatprep.mubr.bf16.mxu0 0
        %1099 = vmatmul.mubr.bf16.gmra.mrb[0].mxu0 %v981
        %v1100 = vpop.f32.mrb[0].mxu0
        %v1101 = vadd.f32 %v809, %v1100
        %v1102 = vpop.f32.mrb[0].mxu0
        %v1103 = vpop.f32.mrb[0].mxu0
        %v1104 = vadd.f32 %v812, %v1103
        %v1105 = vpop.f32.mrb[0].mxu0
        %1106 = vmatprep.mubr.bf16.mxu0 0
        %1107 = vmatmul.mubr.bf16.gmra.mrb[0].mxu0 %v984
        %v1108 = vpop.f32.mrb[0].mxu0
        %v1109 = vadd.f32 %v817, %v1108
        %v1110 = vpop.f32.mrb[0].mxu0
        %v1111 = vpop.f32.mrb[0].mxu0
        %v1112 = vadd.f32 %v820, %v1111
        %v1113 = vpop.f32.mrb[0].mxu0
        %1114 = vmatprep.mubr.bf16.mxu0 0
        %1115 = vmatmul.mubr.bf16.gmra.mrb[0].mxu0 %v987
        %v1116 = vpop.f32.mrb[0].mxu0
        %v1117 = vadd.f32 %v825, %v1116
        %v1118 = vpop.f32.mrb[0].mxu0
        %v1119 = vpop.f32.mrb[0].mxu0
        %v1120 = vadd.f32 %v828, %v1119
        %v1121 = vpop.f32.mrb[0].mxu0
        %1122 = vmatprep.mubr.bf16.mxu0 0
        %1123 = vmatmul.mubr.bf16.gmra.mrb[0].mxu0 %v990
        %v1124 = vpop.f32.mrb[0].mxu0
        %v1125 = vadd.f32 %v833, %v1124
        %v1126 = vpop.f32.mrb[0].mxu0
        %v1127 = vpop.f32.mrb[0].mxu0
        %v1128 = vadd.f32 %v836, %v1127
        %v1129 = vpop.f32.mrb[0].mxu0
        %1130 = vmatprep.mubr.bf16.mxu0 0
        %1131 = vmatmul.mubr.bf16.gmra.mrb[0].mxu0 %v993
        %v1132 = vpop.f32.mrb[0].mxu0
        %v1133 = vadd.f32 %v841, %v1132
        %v1134 = vpop.f32.mrb[0].mxu0
        %v1135 = vpop.f32.mrb[0].mxu0
        %v1136 = vadd.f32 %v844, %v1135
        %v1137 = vpop.f32.mrb[0].mxu0
        %1138 = vmatprep.mubr.bf16.mxu0 0
        %1139 = vmatmul.mubr.bf16.gmra.mrb[0].mxu0 %v996
        %v1140 = vpop.f32.mrb[0].mxu0
        %v1141 = vadd.f32 %v849, %v1140
        %v1142 = vpop.f32.mrb[0].mxu0
        %v1143 = vpop.f32.mrb[0].mxu0
        %v1144 = vadd.f32 %v852, %v1143
        %v1145 = vpop.f32.mrb[0].mxu0
        %1146 = vmatprep.mubr.bf16.mxu0 0
        %1147 = vmatmul.mubr.bf16.gmra.mrb[0].mxu0 %v999
        %v1148 = vpop.f32.mrb[0].mxu0
        %v1149 = vadd.f32 %v857, %v1148
        %v1150 = vpop.f32.mrb[0].mxu0
        %v1151 = vpop.f32.mrb[0].mxu0
        %v1152 = vadd.f32 %v860, %v1151
        %v1153 = vpop.f32.mrb[0].mxu0
        %1154 = vmatprep.mubr.bf16.mxu0 0
        %1155 = vmatmul.mubr.bf16.gmra.mrb[0].mxu0 %v1002
        %v1156 = vpop.f32.mrb[0].mxu0
        %v1157 = vadd.f32 %v865, %v1156
        %v1158 = vpop.f32.mrb[0].mxu0
        %v1159 = vpop.f32.mrb[0].mxu0
        %v1160 = vadd.f32 %v868, %v1159
        %v1161 = vpop.f32.mrb[0].mxu0
        %1162 = vmatprep.mubr.bf16.mxu0 0
        %1163 = vmatmul.mubr.bf16.gmra.mrb[0].mxu0 %v1005
        %v1164 = vpop.f32.mrb[0].mxu0
        %v1165 = vadd.f32 %v873, %v1164
        %v1166 = vpop.f32.mrb[0].mxu0
        %v1167 = vpop.f32.mrb[0].mxu0
        %v1168 = vadd.f32 %v876, %v1167
        %v1169 = vpop.f32.mrb[0].mxu0
        %1170 = vdwg.mxu0
        %vm1187 = vcmask 1042432
        %vm1188 = vcmask 1046532
        %vm1189 = vmor %vm1187, %vm1188
        %v1190 = vrot.slane %v170, 5
        %v1191 = vrot.slane %v1190, 4
        %v1192 = vrot.slane %v171, 5
        %v1193 = vsel %vm1189, %v1191, %v1192
        %v1194 = vrot.slane %v1192, 4
        %v1195 = vrot.slane %v172, 5
        %v1196 = vsel %vm1189, %v1194, %v1195
        %v1197 = vrot.slane %v173, 5
        %v1198 = vrot.slane %v1197, 4
        %v1199 = vrot.slane %v174, 5
        %v1200 = vsel %vm1189, %v1198, %v1199
        %v1201 = vrot.slane %v1199, 4
        %v1202 = vrot.slane %v175, 5
        %v1203 = vsel %vm1189, %v1201, %v1202
        %v1204 = vrot.slane %v176, 5
        %v1205 = vrot.slane %v1204, 4
        %v1206 = vrot.slane %v177, 5
        %v1207 = vsel %vm1189, %v1205, %v1206
        %v1208 = vrot.slane %v1206, 4
        %v1209 = vrot.slane %v178, 5
        %v1210 = vsel %vm1189, %v1208, %v1209
        %v1211 = vrot.slane %v179, 5
        %v1212 = vrot.slane %v1211, 4
        %v1213 = vrot.slane %v180, 5
        %v1214 = vsel %vm1189, %v1212, %v1213
        %v1215 = vrot.slane %v1213, 4
        %v1216 = vrot.slane %v181, 5
        %v1217 = vsel %vm1189, %v1215, %v1216
        %v1218 = vrot.slane %v182, 5
        %v1219 = vrot.slane %v1218, 4
        %v1220 = vrot.slane %v183, 5
        %v1221 = vsel %vm1189, %v1219, %v1220
        %v1222 = vrot.slane %v1220, 4
        %v1223 = vrot.slane %v184, 5
        %v1224 = vsel %vm1189, %v1222, %v1223
        %v1225 = vrot.slane %v185, 5
        %v1226 = vrot.slane %v1225, 4
        %v1227 = vrot.slane %v186, 5
        %v1228 = vsel %vm1189, %v1226, %v1227
        %v1229 = vrot.slane %v1227, 4
        %v1230 = vrot.slane %v187, 5
        %v1231 = vsel %vm1189, %v1229, %v1230
        %v1232 = vrot.slane %v188, 5
        %v1233 = vrot.slane %v1232, 4
        %v1234 = vrot.slane %v189, 5
        %v1235 = vsel %vm1189, %v1233, %v1234
        %v1236 = vrot.slane %v1234, 4
        %v1237 = vrot.slane %v190, 5
        %v1238 = vsel %vm1189, %v1236, %v1237
        %v1239 = vrot.slane %v191, 5
        %v1240 = vrot.slane %v1239, 4
        %v1241 = vrot.slane %v192, 5
        %v1242 = vsel %vm1189, %v1240, %v1241
        %v1243 = vrot.slane %v1241, 4
        %v1244 = vrot.slane %v193, 5
        %v1245 = vsel %vm1189, %v1243, %v1244
        %v1246 = vrot.slane %v194, 5
        %v1247 = vrot.slane %v1246, 4
        %v1248 = vrot.slane %v195, 5
        %v1249 = vsel %vm1189, %v1247, %v1248
        %v1250 = vrot.slane %v1248, 4
        %v1251 = vrot.slane %v196, 5
        %v1252 = vsel %vm1189, %v1250, %v1251
        %v1253 = vrot.slane %v197, 5
        %v1254 = vrot.slane %v1253, 4
        %v1255 = vrot.slane %v198, 5
        %v1256 = vsel %vm1189, %v1254, %v1255
        %v1257 = vrot.slane %v1255, 4
        %v1258 = vrot.slane %v199, 5
        %v1259 = vsel %vm1189, %v1257, %v1258
        %v1260 = vrot.slane %v200, 5
        %v1261 = vrot.slane %v1260, 4
        %v1262 = vrot.slane %v201, 5
        %v1263 = vsel %vm1189, %v1261, %v1262
        %v1264 = vrot.slane %v1262, 4
        %v1265 = vrot.slane %v202, 5
        %v1266 = vsel %vm1189, %v1264, %v1265
        %v1267 = vrot.slane %v203, 5
        %v1268 = vrot.slane %v1267, 4
        %v1269 = vrot.slane %v204, 5
        %v1270 = vsel %vm1189, %v1268, %v1269
        %v1271 = vrot.slane %v1269, 4
        %v1272 = vrot.slane %v205, 5
        %v1273 = vsel %vm1189, %v1271, %v1272
        %v1274 = vrot.slane %v206, 5
        %v1275 = vrot.slane %v1274, 4
        %v1276 = vrot.slane %v207, 5
        %v1277 = vsel %vm1189, %v1275, %v1276
        %v1278 = vrot.slane %v1276, 4
        %v1279 = vrot.slane %v208, 5
        %v1280 = vsel %vm1189, %v1278, %v1279
        %v1281 = vrot.slane %v209, 5
        %v1282 = vrot.slane %v1281, 4
        %v1283 = vrot.slane %v210, 5
        %v1284 = vsel %vm1189, %v1282, %v1283
        %v1285 = vrot.slane %v1283, 4
        %v1286 = vrot.slane %v211, 5
        %v1287 = vsel %vm1189, %v1285, %v1286
        %v1288 = vrot.slane %v212, 5
        %v1289 = vrot.slane %v1288, 4
        %v1290 = vrot.slane %v213, 5
        %v1291 = vsel %vm1189, %v1289, %v1290
        %v1292 = vrot.slane %v1290, 4
        %v1293 = vrot.slane %v214, 5
        %v1294 = vsel %vm1189, %v1292, %v1293
        %v1295 = vrot.slane %v215, 5
        %v1296 = vrot.slane %v1295, 4
        %v1297 = vrot.slane %v216, 5
        %v1298 = vsel %vm1189, %v1296, %v1297
        %v1299 = vrot.slane %v1297, 4
        %v1300 = vrot.slane %v217, 5
        %v1301 = vsel %vm1189, %v1299, %v1300
        %s1302 = scalar_lea.vmem %s1, 4
        %v1303 = vld [vmem:[%s1302] sm:$0x3]
        %v1304 = vunpack.c.l.b16 %v1193
        %v1305 = vunpack.c.l.b16 %v1196
        %v1306 = vunpack.c.l.b16 %v1200
        %v1307 = vunpack.c.l.b16 %v1203
        %v1308 = vunpack.c.l.b16 %v1207
        %v1309 = vunpack.c.l.b16 %v1210
        %v1310 = vunpack.c.l.b16 %v1214
        %v1311 = vunpack.c.l.b16 %v1217
        %v1312 = vunpack.c.l.b16 %v1221
        %v1313 = vunpack.c.l.b16 %v1224
        %v1314 = vunpack.c.l.b16 %v1228
        %v1315 = vunpack.c.l.b16 %v1231
        %v1316 = vunpack.c.l.b16 %v1235
        %v1317 = vunpack.c.l.b16 %v1238
        %v1318 = vunpack.c.l.b16 %v1242
        %v1319 = vunpack.c.l.b16 %v1245
        %v1320 = vunpack.c.l.b16 %v1249
        %v1321 = vunpack.c.l.b16 %v1252
        %v1322 = vunpack.c.l.b16 %v1256
        %v1323 = vunpack.c.l.b16 %v1259
        %v1324 = vunpack.c.l.b16 %v1263
        %v1325 = vunpack.c.l.b16 %v1266
        %v1326 = vunpack.c.l.b16 %v1270
        %v1327 = vunpack.c.l.b16 %v1273
        %v1328 = vunpack.c.l.b16 %v1277
        %v1329 = vunpack.c.l.b16 %v1280
        %v1330 = vunpack.c.l.b16 %v1284
        %v1331 = vunpack.c.l.b16 %v1287
        %v1332 = vunpack.c.l.b16 %v1291
        %v1333 = vunpack.c.l.b16 %v1294
        %v1334 = vunpack.c.l.b16 %v1298
        %v1335 = vunpack.c.l.b16 %v1301
        %v1336 = vpack.c.b16 %v1305, %v1304
        %v1337 = vpack.c.b16 %v1307, %v1306
        %v1338 = vpack.c.b16 %v1309, %v1308
        %v1339 = vpack.c.b16 %v1311, %v1310
        %v1340 = vpack.c.b16 %v1313, %v1312
        %v1341 = vpack.c.b16 %v1315, %v1314
        %v1342 = vpack.c.b16 %v1317, %v1316
        %v1343 = vpack.c.b16 %v1319, %v1318
        %v1344 = vpack.c.b16 %v1321, %v1320
        %v1345 = vpack.c.b16 %v1323, %v1322
        %v1346 = vpack.c.b16 %v1325, %v1324
        %v1347 = vpack.c.b16 %v1327, %v1326
        %v1348 = vpack.c.b16 %v1329, %v1328
        %v1349 = vpack.c.b16 %v1331, %v1330
        %v1350 = vpack.c.b16 %v1333, %v1332
        %v1351 = vpack.c.b16 %v1335, %v1334
        %v1353 = vsel %vm662, %v1336, 0
        %v1356 = vsel %vm662, %v1337, 0
        %v1359 = vsel %vm662, %v1338, 0
        %v1362 = vsel %vm662, %v1339, 0
        %v1365 = vsel %vm662, %v1340, 0
        %v1368 = vsel %vm662, %v1341, 0
        %v1371 = vsel %vm662, %v1342, 0
        %v1374 = vsel %vm662, %v1343, 0
        %v1377 = vsel %vm662, %v1344, 0
        %v1380 = vsel %vm662, %v1345, 0
        %v1383 = vsel %vm662, %v1346, 0
        %v1386 = vsel %vm662, %v1347, 0
        %v1389 = vsel %vm662, %v1348, 0
        %v1392 = vsel %vm662, %v1349, 0
        %v1395 = vsel %vm662, %v1350, 0
        %v1398 = vsel %vm662, %v1351, 0
        %v1401 = vand.u32 %v1303, %v714
        %1403 = vmatprep.subr.bf16.mxu0 0
        %1404 = vmatpush1.bf16.msra.mxu0 %v1401
        %1405 = vmatprep.subr.bf16.mxu0 0
        %1406 = vmatpush1.bf16.msra.mxu0 0
        %1407 = vmatprep.subr.bf16.mxu0 0
        %1408 = vmatpush1.bf16.msra.mxu0 0
        %1409 = vmatprep.subr.bf16.mxu0 0
        %1410 = vmatpush1.bf16.msra.mxu0 0
        %1411 = vmatprep.subr.bf16.mxu0 0
        %1412 = vmatpush1.bf16.msra.mxu0 0
        %1413 = vmatprep.subr.bf16.mxu0 0
        %1414 = vmatpush1.bf16.msra.mxu0 0
        %1415 = vmatprep.subr.bf16.mxu0 0
        %1416 = vmatpush1.bf16.msra.mxu0 0
        %1417 = vmatprep.subr.bf16.mxu0 0
        %1418 = vmatpush1.bf16.msra.mxu0 0
        %1419 = vmatprep.subr.bf16.mxu0 0
        %1420 = vmatpush1.bf16.msra.mxu0 0
        %1421 = vmatprep.subr.bf16.mxu0 0
        %1422 = vmatpush1.bf16.msra.mxu0 0
        %1423 = vmatprep.subr.bf16.mxu0 0
        %1424 = vmatpush1.bf16.msra.mxu0 0
        %1425 = vmatprep.subr.bf16.mxu0 0
        %1426 = vmatpush1.bf16.msra.mxu0 0
        %1427 = vmatprep.subr.bf16.mxu0 0
        %1428 = vmatpush1.bf16.msra.mxu0 0
        %1429 = vmatprep.subr.bf16.mxu0 0
        %1430 = vmatpush1.bf16.msra.mxu0 0
        %1431 = vmatprep.subr.bf16.mxu0 0
        %1432 = vmatpush1.bf16.msra.mxu0 0
        %1433 = vmatprep.subr.bf16.mxu0 0
        %1434 = vmatpush1.bf16.msra.mxu0 0
        %1435 = vmatprep.mubr.bf16.mxu0 0
        %1436 = vmatmul.mubr.bf16.gmra.mrb[0].mxu0 %v1353
        %v1437 = vpop.f32.mrb[0].mxu0
        %v1438 = vadd.f32 0.0, %v1437
        %v1439 = vpop.f32.mrb[0].mxu0
        %v1440 = vpop.f32.mrb[0].mxu0
        %v1441 = vadd.f32 0.0, %v1440
        %v1442 = vpop.f32.mrb[0].mxu0
        %1443 = vmatprep.mubr.bf16.mxu0 0
        %1444 = vmatmul.mubr.bf16.gmra.mrb[0].mxu0 %v1356
        %v1445 = vpop.f32.mrb[0].mxu0
        %v1446 = vadd.f32 0.0, %v1445
        %v1447 = vpop.f32.mrb[0].mxu0
        %v1448 = vpop.f32.mrb[0].mxu0
        %v1449 = vadd.f32 0.0, %v1448
        %v1450 = vpop.f32.mrb[0].mxu0
        %1451 = vmatprep.mubr.bf16.mxu0 0
        %1452 = vmatmul.mubr.bf16.gmra.mrb[0].mxu0 %v1359
        %v1453 = vpop.f32.mrb[0].mxu0
        %v1454 = vadd.f32 0.0, %v1453
        %v1455 = vpop.f32.mrb[0].mxu0
        %v1456 = vpop.f32.mrb[0].mxu0
        %v1457 = vadd.f32 0.0, %v1456
        %v1458 = vpop.f32.mrb[0].mxu0
        %1459 = vmatprep.mubr.bf16.mxu0 0
        %1460 = vmatmul.mubr.bf16.gmra.mrb[0].mxu0 %v1362
        %v1461 = vpop.f32.mrb[0].mxu0
        %v1462 = vadd.f32 0.0, %v1461
        %v1463 = vpop.f32.mrb[0].mxu0
        %v1464 = vpop.f32.mrb[0].mxu0
        %v1465 = vadd.f32 0.0, %v1464
        %v1466 = vpop.f32.mrb[0].mxu0
        %1467 = vmatprep.mubr.bf16.mxu0 0
        %1468 = vmatmul.mubr.bf16.gmra.mrb[0].mxu0 %v1365
        %v1469 = vpop.f32.mrb[0].mxu0
        %v1470 = vadd.f32 0.0, %v1469
        %v1471 = vpop.f32.mrb[0].mxu0
        %v1472 = vpop.f32.mrb[0].mxu0
        %v1473 = vadd.f32 0.0, %v1472
        %v1474 = vpop.f32.mrb[0].mxu0
        %1475 = vmatprep.mubr.bf16.mxu0 0
        %1476 = vmatmul.mubr.bf16.gmra.mrb[0].mxu0 %v1368
        %v1477 = vpop.f32.mrb[0].mxu0
        %v1478 = vadd.f32 0.0, %v1477
        %v1479 = vpop.f32.mrb[0].mxu0
        %v1480 = vpop.f32.mrb[0].mxu0
        %v1481 = vadd.f32 0.0, %v1480
        %v1482 = vpop.f32.mrb[0].mxu0
        %1483 = vmatprep.mubr.bf16.mxu0 0
        %1484 = vmatmul.mubr.bf16.gmra.mrb[0].mxu0 %v1371
        %v1485 = vpop.f32.mrb[0].mxu0
        %v1486 = vadd.f32 0.0, %v1485
        %v1487 = vpop.f32.mrb[0].mxu0
        %v1488 = vpop.f32.mrb[0].mxu0
        %v1489 = vadd.f32 0.0, %v1488
        %v1490 = vpop.f32.mrb[0].mxu0
        %1491 = vmatprep.mubr.bf16.mxu0 0
        %1492 = vmatmul.mubr.bf16.gmra.mrb[0].mxu0 %v1374
        %v1493 = vpop.f32.mrb[0].mxu0
        %v1494 = vadd.f32 0.0, %v1493
        %v1495 = vpop.f32.mrb[0].mxu0
        %v1496 = vpop.f32.mrb[0].mxu0
        %v1497 = vadd.f32 0.0, %v1496
        %v1498 = vpop.f32.mrb[0].mxu0
        %1499 = vmatprep.mubr.bf16.mxu0 0
        %1500 = vmatmul.mubr.bf16.gmra.mrb[0].mxu0 %v1377
        %v1501 = vpop.f32.mrb[0].mxu0
        %v1502 = vadd.f32 0.0, %v1501
        %v1503 = vpop.f32.mrb[0].mxu0
        %v1504 = vpop.f32.mrb[0].mxu0
        %v1505 = vadd.f32 0.0, %v1504
        %v1506 = vpop.f32.mrb[0].mxu0
        %1507 = vmatprep.mubr.bf16.mxu0 0
        %1508 = vmatmul.mubr.bf16.gmra.mrb[0].mxu0 %v1380
        %v1509 = vpop.f32.mrb[0].mxu0
        %v1510 = vadd.f32 0.0, %v1509
        %v1511 = vpop.f32.mrb[0].mxu0
        %v1512 = vpop.f32.mrb[0].mxu0
        %v1513 = vadd.f32 0.0, %v1512
        %v1514 = vpop.f32.mrb[0].mxu0
        %1515 = vmatprep.mubr.bf16.mxu0 0
        %1516 = vmatmul.mubr.bf16.gmra.mrb[0].mxu0 %v1383
        %v1517 = vpop.f32.mrb[0].mxu0
        %v1518 = vadd.f32 0.0, %v1517
        %v1519 = vpop.f32.mrb[0].mxu0
        %v1520 = vpop.f32.mrb[0].mxu0
        %v1521 = vadd.f32 0.0, %v1520
        %v1522 = vpop.f32.mrb[0].mxu0
        %1523 = vmatprep.mubr.bf16.mxu0 0
        %1524 = vmatmul.mubr.bf16.gmra.mrb[0].mxu0 %v1386
        %v1525 = vpop.f32.mrb[0].mxu0
        %v1526 = vadd.f32 0.0, %v1525
        %v1527 = vpop.f32.mrb[0].mxu0
        %v1528 = vpop.f32.mrb[0].mxu0
        %v1529 = vadd.f32 0.0, %v1528
        %v1530 = vpop.f32.mrb[0].mxu0
        %1531 = vmatprep.mubr.bf16.mxu0 0
        %1532 = vmatmul.mubr.bf16.gmra.mrb[0].mxu0 %v1389
        %v1533 = vpop.f32.mrb[0].mxu0
        %v1534 = vadd.f32 0.0, %v1533
        %v1535 = vpop.f32.mrb[0].mxu0
        %v1536 = vpop.f32.mrb[0].mxu0
        %v1537 = vadd.f32 0.0, %v1536
        %v1538 = vpop.f32.mrb[0].mxu0
        %1539 = vmatprep.mubr.bf16.mxu0 0
        %1540 = vmatmul.mubr.bf16.gmra.mrb[0].mxu0 %v1392
        %v1541 = vpop.f32.mrb[0].mxu0
        %v1542 = vadd.f32 0.0, %v1541
        %v1543 = vpop.f32.mrb[0].mxu0
        %v1544 = vpop.f32.mrb[0].mxu0
        %v1545 = vadd.f32 0.0, %v1544
        %v1546 = vpop.f32.mrb[0].mxu0
        %1547 = vmatprep.mubr.bf16.mxu0 0
        %1548 = vmatmul.mubr.bf16.gmra.mrb[0].mxu0 %v1395
        %v1549 = vpop.f32.mrb[0].mxu0
        %v1550 = vadd.f32 0.0, %v1549
        %v1551 = vpop.f32.mrb[0].mxu0
        %v1552 = vpop.f32.mrb[0].mxu0
        %v1553 = vadd.f32 0.0, %v1552
        %v1554 = vpop.f32.mrb[0].mxu0
        %1555 = vmatprep.mubr.bf16.mxu0 0
        %1556 = vmatmul.mubr.bf16.gmra.mrb[0].mxu0 %v1398
        %v1557 = vpop.f32.mrb[0].mxu0
        %v1558 = vadd.f32 0.0, %v1557
        %v1559 = vpop.f32.mrb[0].mxu0
        %v1560 = vpop.f32.mrb[0].mxu0
        %v1561 = vadd.f32 0.0, %v1560
        %v1562 = vpop.f32.mrb[0].mxu0
        %1563 = vdwg.mxu0
        %v1564 = vadd.f32 %v1045, %v1438
        %v1565 = vadd.f32 %v1048, %v1441
        %v1566 = vadd.f32 %v1053, %v1446
        %v1567 = vadd.f32 %v1056, %v1449
        %v1568 = vadd.f32 %v1061, %v1454
        %v1569 = vadd.f32 %v1064, %v1457
        %v1570 = vadd.f32 %v1069, %v1462
        %v1571 = vadd.f32 %v1072, %v1465
        %v1572 = vadd.f32 %v1077, %v1470
        %v1573 = vadd.f32 %v1080, %v1473
        %v1574 = vadd.f32 %v1085, %v1478
        %v1575 = vadd.f32 %v1088, %v1481
        %v1576 = vadd.f32 %v1093, %v1486
        %v1577 = vadd.f32 %v1096, %v1489
        %v1578 = vadd.f32 %v1101, %v1494
        %v1579 = vadd.f32 %v1104, %v1497
        %v1580 = vadd.f32 %v1109, %v1502
        %v1581 = vadd.f32 %v1112, %v1505
        %v1582 = vadd.f32 %v1117, %v1510
        %v1583 = vadd.f32 %v1120, %v1513
        %v1584 = vadd.f32 %v1125, %v1518
        %v1585 = vadd.f32 %v1128, %v1521
        %v1586 = vadd.f32 %v1133, %v1526
        %v1587 = vadd.f32 %v1136, %v1529
        %v1588 = vadd.f32 %v1141, %v1534
        %v1589 = vadd.f32 %v1144, %v1537
        %v1590 = vadd.f32 %v1149, %v1542
        %v1591 = vadd.f32 %v1152, %v1545
        %v1592 = vadd.f32 %v1157, %v1550
        %v1593 = vadd.f32 %v1160, %v1553
        %v1594 = vadd.f32 %v1165, %v1558
        %v1595 = vadd.f32 %v1168, %v1561
        %s1596 = scalar_lea.vmem %s1, 6
        %v1597 = vld [vmem:[%s1596] sm:$0x3]
        %v1600 = vunpack.c.l.b16 %v218
        %v1601 = vunpack.c.l.b16 %v219
        %v1602 = vpack.c.b16 %v1601, %v1600
        %v1604 = vsel %vm662, %v1602, 0
        %v1607 = vand.u32 %v1597, %v714
        %1609 = vmatprep.subr.bf16.mxu0 0
        %1610 = vmatpush1.bf16.msra.mxu0 %v1607
        %1611 = vmatprep.subr.bf16.mxu0 0
        %1612 = vmatpush1.bf16.msra.mxu0 0
        %1613 = vmatprep.subr.bf16.mxu0 0
        %1614 = vmatpush1.bf16.msra.mxu0 0
        %1615 = vmatprep.subr.bf16.mxu0 0
        %1616 = vmatpush1.bf16.msra.mxu0 0
        %1617 = vmatprep.subr.bf16.mxu0 0
        %1618 = vmatpush1.bf16.msra.mxu0 0
        %1619 = vmatprep.subr.bf16.mxu0 0
        %1620 = vmatpush1.bf16.msra.mxu0 0
        %1621 = vmatprep.subr.bf16.mxu0 0
        %1622 = vmatpush1.bf16.msra.mxu0 0
        %1623 = vmatprep.subr.bf16.mxu0 0
        %1624 = vmatpush1.bf16.msra.mxu0 0
        %1625 = vmatprep.subr.bf16.mxu0 0
        %1626 = vmatpush1.bf16.msra.mxu0 0
        %1627 = vmatprep.subr.bf16.mxu0 0
        %1628 = vmatpush1.bf16.msra.mxu0 0
        %1629 = vmatprep.subr.bf16.mxu0 0
        %1630 = vmatpush1.bf16.msra.mxu0 0
        %1631 = vmatprep.subr.bf16.mxu0 0
        %1632 = vmatpush1.bf16.msra.mxu0 0
        %1633 = vmatprep.subr.bf16.mxu0 0
        %1634 = vmatpush1.bf16.msra.mxu0 0
        %1635 = vmatprep.subr.bf16.mxu0 0
        %1636 = vmatpush1.bf16.msra.mxu0 0
        %1637 = vmatprep.subr.bf16.mxu0 0
        %1638 = vmatpush1.bf16.msra.mxu0 0
        %1639 = vmatprep.subr.bf16.mxu0 0
        %1640 = vmatpush1.bf16.msra.mxu0 0
        %1641 = vmatprep.mubr.bf16.mxu0 0
        %1642 = vmatmul.mubr.bf16.gmra.mrb[0].mxu0 %v963
        %v1643 = vpop.f32.mrb[0].mxu0
        %v1644 = vadd.f32 0.0, %v1643
        %v1645 = vpop.f32.mrb[0].mxu0
        %v1646 = vpop.f32.mrb[0].mxu0
        %v1647 = vadd.f32 0.0, %v1646
        %v1648 = vpop.f32.mrb[0].mxu0
        %1649 = vmatprep.mubr.bf16.mxu0 0
        %1650 = vmatmul.mubr.bf16.gmra.mrb[0].mxu0 %v966
        %v1651 = vpop.f32.mrb[0].mxu0
        %v1652 = vadd.f32 0.0, %v1651
        %v1653 = vpop.f32.mrb[0].mxu0
        %v1654 = vpop.f32.mrb[0].mxu0
        %v1655 = vadd.f32 0.0, %v1654
        %v1656 = vpop.f32.mrb[0].mxu0
        %1657 = vmatprep.mubr.bf16.mxu0 0
        %1658 = vmatmul.mubr.bf16.gmra.mrb[0].mxu0 %v969
        %v1659 = vpop.f32.mrb[0].mxu0
        %v1660 = vadd.f32 0.0, %v1659
        %v1661 = vpop.f32.mrb[0].mxu0
        %v1662 = vpop.f32.mrb[0].mxu0
        %v1663 = vadd.f32 0.0, %v1662
        %v1664 = vpop.f32.mrb[0].mxu0
        %1665 = vmatprep.mubr.bf16.mxu0 0
        %1666 = vmatmul.mubr.bf16.gmra.mrb[0].mxu0 %v972
        %v1667 = vpop.f32.mrb[0].mxu0
        %v1668 = vadd.f32 0.0, %v1667
        %v1669 = vpop.f32.mrb[0].mxu0
        %v1670 = vpop.f32.mrb[0].mxu0
        %v1671 = vadd.f32 0.0, %v1670
        %v1672 = vpop.f32.mrb[0].mxu0
        %1673 = vmatprep.mubr.bf16.mxu0 0
        %1674 = vmatmul.mubr.bf16.gmra.mrb[0].mxu0 %v975
        %v1675 = vpop.f32.mrb[0].mxu0
        %v1676 = vadd.f32 0.0, %v1675
        %v1677 = vpop.f32.mrb[0].mxu0
        %v1678 = vpop.f32.mrb[0].mxu0
        %v1679 = vadd.f32 0.0, %v1678
        %v1680 = vpop.f32.mrb[0].mxu0
        %1681 = vmatprep.mubr.bf16.mxu0 0
        %1682 = vmatmul.mubr.bf16.gmra.mrb[0].mxu0 %v978
        %v1683 = vpop.f32.mrb[0].mxu0
        %v1684 = vadd.f32 0.0, %v1683
        %v1685 = vpop.f32.mrb[0].mxu0
        %v1686 = vpop.f32.mrb[0].mxu0
        %v1687 = vadd.f32 0.0, %v1686
        %v1688 = vpop.f32.mrb[0].mxu0
        %1689 = vmatprep.mubr.bf16.mxu0 0
        %1690 = vmatmul.mubr.bf16.gmra.mrb[0].mxu0 %v981
        %v1691 = vpop.f32.mrb[0].mxu0
        %v1692 = vadd.f32 0.0, %v1691
        %v1693 = vpop.f32.mrb[0].mxu0
        %v1694 = vpop.f32.mrb[0].mxu0
        %v1695 = vadd.f32 0.0, %v1694
        %v1696 = vpop.f32.mrb[0].mxu0
        %1697 = vmatprep.mubr.bf16.mxu0 0
        %1698 = vmatmul.mubr.bf16.gmra.mrb[0].mxu0 %v984
        %v1699 = vpop.f32.mrb[0].mxu0
        %v1700 = vadd.f32 0.0, %v1699
        %v1701 = vpop.f32.mrb[0].mxu0
        %v1702 = vpop.f32.mrb[0].mxu0
        %v1703 = vadd.f32 0.0, %v1702
        %v1704 = vpop.f32.mrb[0].mxu0
        %1705 = vmatprep.mubr.bf16.mxu0 0
        %1706 = vmatmul.mubr.bf16.gmra.mrb[0].mxu0 %v987
        %v1707 = vpop.f32.mrb[0].mxu0
        %v1708 = vadd.f32 0.0, %v1707
        %v1709 = vpop.f32.mrb[0].mxu0
        %v1710 = vpop.f32.mrb[0].mxu0
        %v1711 = vadd.f32 0.0, %v1710
        %v1712 = vpop.f32.mrb[0].mxu0
        %1713 = vmatprep.mubr.bf16.mxu0 0
        %1714 = vmatmul.mubr.bf16.gmra.mrb[0].mxu0 %v990
        %v1715 = vpop.f32.mrb[0].mxu0
        %v1716 = vadd.f32 0.0, %v1715
        %v1717 = vpop.f32.mrb[0].mxu0
        %v1718 = vpop.f32.mrb[0].mxu0
        %v1719 = vadd.f32 0.0, %v1718
        %v1720 = vpop.f32.mrb[0].mxu0
        %1721 = vmatprep.mubr.bf16.mxu0 0
        %1722 = vmatmul.mubr.bf16.gmra.mrb[0].mxu0 %v993
        %v1723 = vpop.f32.mrb[0].mxu0
        %v1724 = vadd.f32 0.0, %v1723
        %v1725 = vpop.f32.mrb[0].mxu0
        %v1726 = vpop.f32.mrb[0].mxu0
        %v1727 = vadd.f32 0.0, %v1726
        %v1728 = vpop.f32.mrb[0].mxu0
        %1729 = vmatprep.mubr.bf16.mxu0 0
        %1730 = vmatmul.mubr.bf16.gmra.mrb[0].mxu0 %v996
        %v1731 = vpop.f32.mrb[0].mxu0
        %v1732 = vadd.f32 0.0, %v1731
        %v1733 = vpop.f32.mrb[0].mxu0
        %v1734 = vpop.f32.mrb[0].mxu0
        %v1735 = vadd.f32 0.0, %v1734
        %v1736 = vpop.f32.mrb[0].mxu0
        %1737 = vmatprep.mubr.bf16.mxu0 0
        %1738 = vmatmul.mubr.bf16.gmra.mrb[0].mxu0 %v999
        %v1739 = vpop.f32.mrb[0].mxu0
        %v1740 = vadd.f32 0.0, %v1739
        %v1741 = vpop.f32.mrb[0].mxu0
        %v1742 = vpop.f32.mrb[0].mxu0
        %v1743 = vadd.f32 0.0, %v1742
        %v1744 = vpop.f32.mrb[0].mxu0
        %1745 = vmatprep.mubr.bf16.mxu0 0
        %1746 = vmatmul.mubr.bf16.gmra.mrb[0].mxu0 %v1002
        %v1747 = vpop.f32.mrb[0].mxu0
        %v1748 = vadd.f32 0.0, %v1747
        %v1749 = vpop.f32.mrb[0].mxu0
        %v1750 = vpop.f32.mrb[0].mxu0
        %v1751 = vadd.f32 0.0, %v1750
        %v1752 = vpop.f32.mrb[0].mxu0
        %1753 = vmatprep.mubr.bf16.mxu0 0
        %1754 = vmatmul.mubr.bf16.gmra.mrb[0].mxu0 %v1005
        %v1755 = vpop.f32.mrb[0].mxu0
        %v1756 = vadd.f32 0.0, %v1755
        %v1757 = vpop.f32.mrb[0].mxu0
        %v1758 = vpop.f32.mrb[0].mxu0
        %v1759 = vadd.f32 0.0, %v1758
        %v1760 = vpop.f32.mrb[0].mxu0
        %1761 = vmatprep.mubr.bf16.mxu0 0
        %1762 = vmatmul.mubr.bf16.gmra.mrb[0].mxu0 %v1604
        %v1763 = vpop.f32.mrb[0].mxu0
        %v1764 = vadd.f32 0.0, %v1763
        %v1765 = vpop.f32.mrb[0].mxu0
        %v1766 = vpop.f32.mrb[0].mxu0
        %v1767 = vadd.f32 0.0, %v1766
        %v1768 = vpop.f32.mrb[0].mxu0
        %1769 = vdwg.mxu0
        %v1770 = vadd.f32 %v1564, %v1644
        %v1771 = vadd.f32 %v1565, %v1647
        %v1772 = vadd.f32 %v1566, %v1652
        %v1773 = vadd.f32 %v1567, %v1655
        %v1774 = vadd.f32 %v1568, %v1660
        %v1775 = vadd.f32 %v1569, %v1663
        %v1776 = vadd.f32 %v1570, %v1668
        %v1777 = vadd.f32 %v1571, %v1671
        %v1778 = vadd.f32 %v1572, %v1676
        %v1779 = vadd.f32 %v1573, %v1679
        %v1780 = vadd.f32 %v1574, %v1684
        %v1781 = vadd.f32 %v1575, %v1687
        %v1782 = vadd.f32 %v1576, %v1692
        %v1783 = vadd.f32 %v1577, %v1695
        %v1784 = vadd.f32 %v1578, %v1700
        %v1785 = vadd.f32 %v1579, %v1703
        %v1786 = vadd.f32 %v1580, %v1708
        %v1787 = vadd.f32 %v1581, %v1711
        %v1788 = vadd.f32 %v1582, %v1716
        %v1789 = vadd.f32 %v1583, %v1719
        %v1790 = vadd.f32 %v1584, %v1724
        %v1791 = vadd.f32 %v1585, %v1727
        %v1792 = vadd.f32 %v1586, %v1732
        %v1793 = vadd.f32 %v1587, %v1735
        %v1794 = vadd.f32 %v1588, %v1740
        %v1795 = vadd.f32 %v1589, %v1743
        %v1796 = vadd.f32 %v1590, %v1748
        %v1797 = vadd.f32 %v1591, %v1751
        %v1798 = vadd.f32 %v1592, %v1756
        %v1799 = vadd.f32 %v1593, %v1759
        %v1800 = vadd.f32 %v1594, %v1764
        %v1801 = vadd.f32 %v1595, %v1767
        %v1803 = vshrl.u32 %v218, 16
        %v1805 = vrot.slane %v1803, 4
        %v1806 = vshll.u32 %v218, 16
        %v1808 = vrot.slane %v1806, 5
        %v1809 = vor.u32 %v1805, %v1808
        %v1810 = vrot.slane %v1809, 4
        %v1812 = vshll.u32 %v219, 16
        %v1814 = vrot.slane %v1812, 5
        %v1815 = vsel %vm227, %v1810, %v1814
        %v1816 = vshrl.u32 %v219, 16
        %v1818 = vrot.slane %v1816, 4
        %v1819 = vor.u32 %v1818, %v1814
        %v1820 = vrot.slane %v1819, 4
        %v1822 = vshll.u32 %v220, 16
        %v1824 = vrot.slane %v1822, 5
        %v1825 = vsel %vm227, %v1820, %v1824
        %s1826 = scalar_lea.vmem %s1, 8
        %v1827 = vld [vmem:[%s1826] sm:$0x3]
        %v1828 = vunpack.c.l.b16 %v1815
        %v1829 = vunpack.c.l.b16 %v1825
        %v1830 = vpack.c.b16 %v1829, %v1828
        %v1832 = vsel %vm662, %v1830, 0
        %v1835 = vand.u32 %v1827, %v714
        %1837 = vmatprep.subr.bf16.mxu0 0
        %1838 = vmatpush1.bf16.msra.mxu0 %v1835
        %1839 = vmatprep.subr.bf16.mxu0 0
        %1840 = vmatpush1.bf16.msra.mxu0 0
        %1841 = vmatprep.subr.bf16.mxu0 0
        %1842 = vmatpush1.bf16.msra.mxu0 0
        %1843 = vmatprep.subr.bf16.mxu0 0
        %1844 = vmatpush1.bf16.msra.mxu0 0
        %1845 = vmatprep.subr.bf16.mxu0 0
        %1846 = vmatpush1.bf16.msra.mxu0 0
        %1847 = vmatprep.subr.bf16.mxu0 0
        %1848 = vmatpush1.bf16.msra.mxu0 0
        %1849 = vmatprep.subr.bf16.mxu0 0
        %1850 = vmatpush1.bf16.msra.mxu0 0
        %1851 = vmatprep.subr.bf16.mxu0 0
        %1852 = vmatpush1.bf16.msra.mxu0 0
        %1853 = vmatprep.subr.bf16.mxu0 0
        %1854 = vmatpush1.bf16.msra.mxu0 0
        %1855 = vmatprep.subr.bf16.mxu0 0
        %1856 = vmatpush1.bf16.msra.mxu0 0
        %1857 = vmatprep.subr.bf16.mxu0 0
        %1858 = vmatpush1.bf16.msra.mxu0 0
        %1859 = vmatprep.subr.bf16.mxu0 0
        %1860 = vmatpush1.bf16.msra.mxu0 0
        %1861 = vmatprep.subr.bf16.mxu0 0
        %1862 = vmatpush1.bf16.msra.mxu0 0
        %1863 = vmatprep.subr.bf16.mxu0 0
        %1864 = vmatpush1.bf16.msra.mxu0 0
        %1865 = vmatprep.subr.bf16.mxu0 0
        %1866 = vmatpush1.bf16.msra.mxu0 0
        %1867 = vmatprep.subr.bf16.mxu0 0
        %1868 = vmatpush1.bf16.msra.mxu0 0
        %1869 = vmatprep.mubr.bf16.mxu0 0
        %1870 = vmatmul.mubr.bf16.gmra.mrb[0].mxu0 %v667
        %v1871 = vpop.f32.mrb[0].mxu0
        %v1872 = vadd.f32 0.0, %v1871
        %v1873 = vpop.f32.mrb[0].mxu0
        %v1874 = vpop.f32.mrb[0].mxu0
        %v1875 = vadd.f32 0.0, %v1874
        %v1876 = vpop.f32.mrb[0].mxu0
        %1877 = vmatprep.mubr.bf16.mxu0 0
        %1878 = vmatmul.mubr.bf16.gmra.mrb[0].mxu0 %v670
        %v1879 = vpop.f32.mrb[0].mxu0
        %v1880 = vadd.f32 0.0, %v1879
        %v1881 = vpop.f32.mrb[0].mxu0
        %v1882 = vpop.f32.mrb[0].mxu0
        %v1883 = vadd.f32 0.0, %v1882
        %v1884 = vpop.f32.mrb[0].mxu0
        %1885 = vmatprep.mubr.bf16.mxu0 0
        %1886 = vmatmul.mubr.bf16.gmra.mrb[0].mxu0 %v673
        %v1887 = vpop.f32.mrb[0].mxu0
        %v1888 = vadd.f32 0.0, %v1887
        %v1889 = vpop.f32.mrb[0].mxu0
        %v1890 = vpop.f32.mrb[0].mxu0
        %v1891 = vadd.f32 0.0, %v1890
        %v1892 = vpop.f32.mrb[0].mxu0
        %1893 = vmatprep.mubr.bf16.mxu0 0
        %1894 = vmatmul.mubr.bf16.gmra.mrb[0].mxu0 %v676
        %v1895 = vpop.f32.mrb[0].mxu0
        %v1896 = vadd.f32 0.0, %v1895
        %v1897 = vpop.f32.mrb[0].mxu0
        %v1898 = vpop.f32.mrb[0].mxu0
        %v1899 = vadd.f32 0.0, %v1898
        %v1900 = vpop.f32.mrb[0].mxu0
        %1901 = vmatprep.mubr.bf16.mxu0 0
        %1902 = vmatmul.mubr.bf16.gmra.mrb[0].mxu0 %v679
        %v1903 = vpop.f32.mrb[0].mxu0
        %v1904 = vadd.f32 0.0, %v1903
        %v1905 = vpop.f32.mrb[0].mxu0
        %v1906 = vpop.f32.mrb[0].mxu0
        %v1907 = vadd.f32 0.0, %v1906
        %v1908 = vpop.f32.mrb[0].mxu0
        %1909 = vmatprep.mubr.bf16.mxu0 0
        %1910 = vmatmul.mubr.bf16.gmra.mrb[0].mxu0 %v682
        %v1911 = vpop.f32.mrb[0].mxu0
        %v1912 = vadd.f32 0.0, %v1911
        %v1913 = vpop.f32.mrb[0].mxu0
        %v1914 = vpop.f32.mrb[0].mxu0
        %v1915 = vadd.f32 0.0, %v1914
        %v1916 = vpop.f32.mrb[0].mxu0
        %1917 = vmatprep.mubr.bf16.mxu0 0
        %1918 = vmatmul.mubr.bf16.gmra.mrb[0].mxu0 %v685
        %v1919 = vpop.f32.mrb[0].mxu0
        %v1920 = vadd.f32 0.0, %v1919
        %v1921 = vpop.f32.mrb[0].mxu0
        %v1922 = vpop.f32.mrb[0].mxu0
        %v1923 = vadd.f32 0.0, %v1922
        %v1924 = vpop.f32.mrb[0].mxu0
        %1925 = vmatprep.mubr.bf16.mxu0 0
        %1926 = vmatmul.mubr.bf16.gmra.mrb[0].mxu0 %v688
        %v1927 = vpop.f32.mrb[0].mxu0
        %v1928 = vadd.f32 0.0, %v1927
        %v1929 = vpop.f32.mrb[0].mxu0
        %v1930 = vpop.f32.mrb[0].mxu0
        %v1931 = vadd.f32 0.0, %v1930
        %v1932 = vpop.f32.mrb[0].mxu0
        %1933 = vmatprep.mubr.bf16.mxu0 0
        %1934 = vmatmul.mubr.bf16.gmra.mrb[0].mxu0 %v691
        %v1935 = vpop.f32.mrb[0].mxu0
        %v1936 = vadd.f32 0.0, %v1935
        %v1937 = vpop.f32.mrb[0].mxu0
        %v1938 = vpop.f32.mrb[0].mxu0
        %v1939 = vadd.f32 0.0, %v1938
        %v1940 = vpop.f32.mrb[0].mxu0
        %1941 = vmatprep.mubr.bf16.mxu0 0
        %1942 = vmatmul.mubr.bf16.gmra.mrb[0].mxu0 %v694
        %v1943 = vpop.f32.mrb[0].mxu0
        %v1944 = vadd.f32 0.0, %v1943
        %v1945 = vpop.f32.mrb[0].mxu0
        %v1946 = vpop.f32.mrb[0].mxu0
        %v1947 = vadd.f32 0.0, %v1946
        %v1948 = vpop.f32.mrb[0].mxu0
        %1949 = vmatprep.mubr.bf16.mxu0 0
        %1950 = vmatmul.mubr.bf16.gmra.mrb[0].mxu0 %v697
        %v1951 = vpop.f32.mrb[0].mxu0
        %v1952 = vadd.f32 0.0, %v1951
        %v1953 = vpop.f32.mrb[0].mxu0
        %v1954 = vpop.f32.mrb[0].mxu0
        %v1955 = vadd.f32 0.0, %v1954
        %v1956 = vpop.f32.mrb[0].mxu0
        %1957 = vmatprep.mubr.bf16.mxu0 0
        %1958 = vmatmul.mubr.bf16.gmra.mrb[0].mxu0 %v700
        %v1959 = vpop.f32.mrb[0].mxu0
        %v1960 = vadd.f32 0.0, %v1959
        %v1961 = vpop.f32.mrb[0].mxu0
        %v1962 = vpop.f32.mrb[0].mxu0
        %v1963 = vadd.f32 0.0, %v1962
        %v1964 = vpop.f32.mrb[0].mxu0
        %1965 = vmatprep.mubr.bf16.mxu0 0
        %1966 = vmatmul.mubr.bf16.gmra.mrb[0].mxu0 %v703
        %v1967 = vpop.f32.mrb[0].mxu0
        %v1968 = vadd.f32 0.0, %v1967
        %v1969 = vpop.f32.mrb[0].mxu0
        %v1970 = vpop.f32.mrb[0].mxu0
        %v1971 = vadd.f32 0.0, %v1970
        %v1972 = vpop.f32.mrb[0].mxu0
        %1973 = vmatprep.mubr.bf16.mxu0 0
        %1974 = vmatmul.mubr.bf16.gmra.mrb[0].mxu0 %v706
        %v1975 = vpop.f32.mrb[0].mxu0
        %v1976 = vadd.f32 0.0, %v1975
        %v1977 = vpop.f32.mrb[0].mxu0
        %v1978 = vpop.f32.mrb[0].mxu0
        %v1979 = vadd.f32 0.0, %v1978
        %v1980 = vpop.f32.mrb[0].mxu0
        %1981 = vmatprep.mubr.bf16.mxu0 0
        %1982 = vmatmul.mubr.bf16.gmra.mrb[0].mxu0 %v709
        %v1983 = vpop.f32.mrb[0].mxu0
        %v1984 = vadd.f32 0.0, %v1983
        %v1985 = vpop.f32.mrb[0].mxu0
        %v1986 = vpop.f32.mrb[0].mxu0
        %v1987 = vadd.f32 0.0, %v1986
        %v1988 = vpop.f32.mrb[0].mxu0
        %1989 = vmatprep.mubr.bf16.mxu0 0
        %1990 = vmatmul.mubr.bf16.gmra.mrb[0].mxu0 %v1832
        %v1991 = vpop.f32.mrb[0].mxu0
        %v1992 = vadd.f32 0.0, %v1991
        %v1993 = vpop.f32.mrb[0].mxu0
        %v1994 = vpop.f32.mrb[0].mxu0
        %v1995 = vadd.f32 0.0, %v1994
        %v1996 = vpop.f32.mrb[0].mxu0
        %1997 = vdwg.mxu0
        %v1998 = vadd.f32 %v1770, %v1872
        %v1999 = vadd.f32 %v1771, %v1875
        %v2000 = vadd.f32 %v1772, %v1880
        %v2001 = vadd.f32 %v1773, %v1883
        %v2002 = vadd.f32 %v1774, %v1888
        %v2003 = vadd.f32 %v1775, %v1891
        %v2004 = vadd.f32 %v1776, %v1896
        %v2005 = vadd.f32 %v1777, %v1899
        %v2006 = vadd.f32 %v1778, %v1904
        %v2007 = vadd.f32 %v1779, %v1907
        %v2008 = vadd.f32 %v1780, %v1912
        %v2009 = vadd.f32 %v1781, %v1915
        %v2010 = vadd.f32 %v1782, %v1920
        %v2011 = vadd.f32 %v1783, %v1923
        %v2012 = vadd.f32 %v1784, %v1928
        %v2013 = vadd.f32 %v1785, %v1931
        %v2014 = vadd.f32 %v1786, %v1936
        %v2015 = vadd.f32 %v1787, %v1939
        %v2016 = vadd.f32 %v1788, %v1944
        %v2017 = vadd.f32 %v1789, %v1947
        %v2018 = vadd.f32 %v1790, %v1952
        %v2019 = vadd.f32 %v1791, %v1955
        %v2020 = vadd.f32 %v1792, %v1960
        %v2021 = vadd.f32 %v1793, %v1963
        %v2022 = vadd.f32 %v1794, %v1968
        %v2023 = vadd.f32 %v1795, %v1971
        %v2024 = vadd.f32 %v1796, %v1976
        %v2025 = vadd.f32 %v1797, %v1979
        %v2026 = vadd.f32 %v1798, %v1984
        %v2027 = vadd.f32 %v1799, %v1987
        %v2028 = vadd.f32 %v1800, %v1992
        %v2029 = vadd.f32 %v1801, %v1995
        %v2031 = vrot.slane %v218, 5
        %v2032 = vrot.slane %v2031, 4
        %v2033 = vrot.slane %v219, 5
        %v2034 = vsel %vm1189, %v2032, %v2033
        %v2035 = vrot.slane %v2033, 4
        %v2036 = vrot.slane %v220, 5
        %v2037 = vsel %vm1189, %v2035, %v2036
        %s2038 = scalar_lea.vmem %s1, 10
        %v2039 = vld [vmem:[%s2038] sm:$0x3]
        %v2040 = vunpack.c.l.b16 %v2034
        %v2041 = vunpack.c.l.b16 %v2037
        %v2042 = vpack.c.b16 %v2041, %v2040
        %v2044 = vsel %vm662, %v2042, 0
        %v2047 = vand.u32 %v2039, %v714
        %2049 = vmatprep.subr.bf16.mxu0 0
        %2050 = vmatpush1.bf16.msra.mxu0 %v2047
        %2051 = vmatprep.subr.bf16.mxu0 0
        %2052 = vmatpush1.bf16.msra.mxu0 0
        %2053 = vmatprep.subr.bf16.mxu0 0
        %2054 = vmatpush1.bf16.msra.mxu0 0
        %2055 = vmatprep.subr.bf16.mxu0 0
        %2056 = vmatpush1.bf16.msra.mxu0 0
        %2057 = vmatprep.subr.bf16.mxu0 0
        %2058 = vmatpush1.bf16.msra.mxu0 0
        %2059 = vmatprep.subr.bf16.mxu0 0
        %2060 = vmatpush1.bf16.msra.mxu0 0
        %2061 = vmatprep.subr.bf16.mxu0 0
        %2062 = vmatpush1.bf16.msra.mxu0 0
        %2063 = vmatprep.subr.bf16.mxu0 0
        %2064 = vmatpush1.bf16.msra.mxu0 0
        %2065 = vmatprep.subr.bf16.mxu0 0
        %2066 = vmatpush1.bf16.msra.mxu0 0
        %2067 = vmatprep.subr.bf16.mxu0 0
        %2068 = vmatpush1.bf16.msra.mxu0 0
        %2069 = vmatprep.subr.bf16.mxu0 0
        %2070 = vmatpush1.bf16.msra.mxu0 0
        %2071 = vmatprep.subr.bf16.mxu0 0
        %2072 = vmatpush1.bf16.msra.mxu0 0
        %2073 = vmatprep.subr.bf16.mxu0 0
        %2074 = vmatpush1.bf16.msra.mxu0 0
        %2075 = vmatprep.subr.bf16.mxu0 0
        %2076 = vmatpush1.bf16.msra.mxu0 0
        %2077 = vmatprep.subr.bf16.mxu0 0
        %2078 = vmatpush1.bf16.msra.mxu0 0
        %2079 = vmatprep.subr.bf16.mxu0 0
        %2080 = vmatpush1.bf16.msra.mxu0 0
        %2081 = vmatprep.mubr.bf16.mxu0 0
        %2082 = vmatmul.mubr.bf16.gmra.mrb[0].mxu0 %v1356
        %v2083 = vpop.f32.mrb[0].mxu0
        %v2084 = vadd.f32 0.0, %v2083
        %v2085 = vpop.f32.mrb[0].mxu0
        %v2086 = vpop.f32.mrb[0].mxu0
        %v2087 = vadd.f32 0.0, %v2086
        %v2088 = vpop.f32.mrb[0].mxu0
        %2089 = vmatprep.mubr.bf16.mxu0 0
        %2090 = vmatmul.mubr.bf16.gmra.mrb[0].mxu0 %v1359
        %v2091 = vpop.f32.mrb[0].mxu0
        %v2092 = vadd.f32 0.0, %v2091
        %v2093 = vpop.f32.mrb[0].mxu0
        %v2094 = vpop.f32.mrb[0].mxu0
        %v2095 = vadd.f32 0.0, %v2094
        %v2096 = vpop.f32.mrb[0].mxu0
        %2097 = vmatprep.mubr.bf16.mxu0 0
        %2098 = vmatmul.mubr.bf16.gmra.mrb[0].mxu0 %v1362
        %v2099 = vpop.f32.mrb[0].mxu0
        %v2100 = vadd.f32 0.0, %v2099
        %v2101 = vpop.f32.mrb[0].mxu0
        %v2102 = vpop.f32.mrb[0].mxu0
        %v2103 = vadd.f32 0.0, %v2102
        %v2104 = vpop.f32.mrb[0].mxu0
        %2105 = vmatprep.mubr.bf16.mxu0 0
        %2106 = vmatmul.mubr.bf16.gmra.mrb[0].mxu0 %v1365
        %v2107 = vpop.f32.mrb[0].mxu0
        %v2108 = vadd.f32 0.0, %v2107
        %v2109 = vpop.f32.mrb[0].mxu0
        %v2110 = vpop.f32.mrb[0].mxu0
        %v2111 = vadd.f32 0.0, %v2110
        %v2112 = vpop.f32.mrb[0].mxu0
        %2113 = vmatprep.mubr.bf16.mxu0 0
        %2114 = vmatmul.mubr.bf16.gmra.mrb[0].mxu0 %v1368
        %v2115 = vpop.f32.mrb[0].mxu0
        %v2116 = vadd.f32 0.0, %v2115
        %v2117 = vpop.f32.mrb[0].mxu0
        %v2118 = vpop.f32.mrb[0].mxu0
        %v2119 = vadd.f32 0.0, %v2118
        %v2120 = vpop.f32.mrb[0].mxu0
        %2121 = vmatprep.mubr.bf16.mxu0 0
        %2122 = vmatmul.mubr.bf16.gmra.mrb[0].mxu0 %v1371
        %v2123 = vpop.f32.mrb[0].mxu0
        %v2124 = vadd.f32 0.0, %v2123
        %v2125 = vpop.f32.mrb[0].mxu0
        %v2126 = vpop.f32.mrb[0].mxu0
        %v2127 = vadd.f32 0.0, %v2126
        %v2128 = vpop.f32.mrb[0].mxu0
        %2129 = vmatprep.mubr.bf16.mxu0 0
        %2130 = vmatmul.mubr.bf16.gmra.mrb[0].mxu0 %v1374
        %v2131 = vpop.f32.mrb[0].mxu0
        %v2132 = vadd.f32 0.0, %v2131
        %v2133 = vpop.f32.mrb[0].mxu0
        %v2134 = vpop.f32.mrb[0].mxu0
        %v2135 = vadd.f32 0.0, %v2134
        %v2136 = vpop.f32.mrb[0].mxu0
        %2137 = vmatprep.mubr.bf16.mxu0 0
        %2138 = vmatmul.mubr.bf16.gmra.mrb[0].mxu0 %v1377
        %v2139 = vpop.f32.mrb[0].mxu0
        %v2140 = vadd.f32 0.0, %v2139
        %v2141 = vpop.f32.mrb[0].mxu0
        %v2142 = vpop.f32.mrb[0].mxu0
        %v2143 = vadd.f32 0.0, %v2142
        %v2144 = vpop.f32.mrb[0].mxu0
        %2145 = vmatprep.mubr.bf16.mxu0 0
        %2146 = vmatmul.mubr.bf16.gmra.mrb[0].mxu0 %v1380
        %v2147 = vpop.f32.mrb[0].mxu0
        %v2148 = vadd.f32 0.0, %v2147
        %v2149 = vpop.f32.mrb[0].mxu0
        %v2150 = vpop.f32.mrb[0].mxu0
        %v2151 = vadd.f32 0.0, %v2150
        %v2152 = vpop.f32.mrb[0].mxu0
        %2153 = vmatprep.mubr.bf16.mxu0 0
        %2154 = vmatmul.mubr.bf16.gmra.mrb[0].mxu0 %v1383
        %v2155 = vpop.f32.mrb[0].mxu0
        %v2156 = vadd.f32 0.0, %v2155
        %v2157 = vpop.f32.mrb[0].mxu0
        %v2158 = vpop.f32.mrb[0].mxu0
        %v2159 = vadd.f32 0.0, %v2158
        %v2160 = vpop.f32.mrb[0].mxu0
        %2161 = vmatprep.mubr.bf16.mxu0 0
        %2162 = vmatmul.mubr.bf16.gmra.mrb[0].mxu0 %v1386
        %v2163 = vpop.f32.mrb[0].mxu0
        %v2164 = vadd.f32 0.0, %v2163
        %v2165 = vpop.f32.mrb[0].mxu0
        %v2166 = vpop.f32.mrb[0].mxu0
        %v2167 = vadd.f32 0.0, %v2166
        %v2168 = vpop.f32.mrb[0].mxu0
        %2169 = vmatprep.mubr.bf16.mxu0 0
        %2170 = vmatmul.mubr.bf16.gmra.mrb[0].mxu0 %v1389
        %v2171 = vpop.f32.mrb[0].mxu0
        %v2172 = vadd.f32 0.0, %v2171
        %v2173 = vpop.f32.mrb[0].mxu0
        %v2174 = vpop.f32.mrb[0].mxu0
        %v2175 = vadd.f32 0.0, %v2174
        %v2176 = vpop.f32.mrb[0].mxu0
        %2177 = vmatprep.mubr.bf16.mxu0 0
        %2178 = vmatmul.mubr.bf16.gmra.mrb[0].mxu0 %v1392
        %v2179 = vpop.f32.mrb[0].mxu0
        %v2180 = vadd.f32 0.0, %v2179
        %v2181 = vpop.f32.mrb[0].mxu0
        %v2182 = vpop.f32.mrb[0].mxu0
        %v2183 = vadd.f32 0.0, %v2182
        %v2184 = vpop.f32.mrb[0].mxu0
        %2185 = vmatprep.mubr.bf16.mxu0 0
        %2186 = vmatmul.mubr.bf16.gmra.mrb[0].mxu0 %v1395
        %v2187 = vpop.f32.mrb[0].mxu0
        %v2188 = vadd.f32 0.0, %v2187
        %v2189 = vpop.f32.mrb[0].mxu0
        %v2190 = vpop.f32.mrb[0].mxu0
        %v2191 = vadd.f32 0.0, %v2190
        %v2192 = vpop.f32.mrb[0].mxu0
        %2193 = vmatprep.mubr.bf16.mxu0 0
        %2194 = vmatmul.mubr.bf16.gmra.mrb[0].mxu0 %v1398
        %v2195 = vpop.f32.mrb[0].mxu0
        %v2196 = vadd.f32 0.0, %v2195
        %v2197 = vpop.f32.mrb[0].mxu0
        %v2198 = vpop.f32.mrb[0].mxu0
        %v2199 = vadd.f32 0.0, %v2198
        %v2200 = vpop.f32.mrb[0].mxu0
        %2201 = vmatprep.mubr.bf16.mxu0 0
        %2202 = vmatmul.mubr.bf16.gmra.mrb[0].mxu0 %v2044
        %v2203 = vpop.f32.mrb[0].mxu0
        %v2204 = vadd.f32 0.0, %v2203
        %v2205 = vpop.f32.mrb[0].mxu0
        %v2206 = vpop.f32.mrb[0].mxu0
        %v2207 = vadd.f32 0.0, %v2206
        %v2208 = vpop.f32.mrb[0].mxu0
        %2209 = vdwg.mxu0
        %v2210 = vadd.f32 %v1998, %v2084
        %v2211 = vadd.f32 %v1999, %v2087
        %v2212 = vadd.f32 %v2000, %v2092
        %v2213 = vadd.f32 %v2001, %v2095
        %v2214 = vadd.f32 %v2002, %v2100
        %v2215 = vadd.f32 %v2003, %v2103
        %v2216 = vadd.f32 %v2004, %v2108
        %v2217 = vadd.f32 %v2005, %v2111
        %v2218 = vadd.f32 %v2006, %v2116
        %v2219 = vadd.f32 %v2007, %v2119
        %v2220 = vadd.f32 %v2008, %v2124
        %v2221 = vadd.f32 %v2009, %v2127
        %v2222 = vadd.f32 %v2010, %v2132
        %v2223 = vadd.f32 %v2011, %v2135
        %v2224 = vadd.f32 %v2012, %v2140
        %v2225 = vadd.f32 %v2013, %v2143
        %v2226 = vadd.f32 %v2014, %v2148
        %v2227 = vadd.f32 %v2015, %v2151
        %v2228 = vadd.f32 %v2016, %v2156
        %v2229 = vadd.f32 %v2017, %v2159
        %v2230 = vadd.f32 %v2018, %v2164
        %v2231 = vadd.f32 %v2019, %v2167
        %v2232 = vadd.f32 %v2020, %v2172
        %v2233 = vadd.f32 %v2021, %v2175
        %v2234 = vadd.f32 %v2022, %v2180
        %v2235 = vadd.f32 %v2023, %v2183
        %v2236 = vadd.f32 %v2024, %v2188
        %v2237 = vadd.f32 %v2025, %v2191
        %v2238 = vadd.f32 %v2026, %v2196
        %v2239 = vadd.f32 %v2027, %v2199
        %v2240 = vadd.f32 %v2028, %v2204
        %v2241 = vadd.f32 %v2029, %v2207
        %s2242 = scalar_lea.vmem %s1, 12
        %v2243 = vld [vmem:[%s2242] sm:$0x3]
        %v2246 = vunpack.c.l.b16 %v221
        %v2247 = vunpack.c.l.b16 %v222
        %v2248 = vpack.c.b16 %v2247, %v2246
        %v2250 = vsel %vm662, %v2248, 0
        %v2253 = vand.u32 %v2243, %v714
        %2255 = vmatprep.subr.bf16.mxu0 0
        %2256 = vmatpush1.bf16.msra.mxu0 %v2253
        %2257 = vmatprep.subr.bf16.mxu0 0
        %2258 = vmatpush1.bf16.msra.mxu0 0
        %2259 = vmatprep.subr.bf16.mxu0 0
        %2260 = vmatpush1.bf16.msra.mxu0 0
        %2261 = vmatprep.subr.bf16.mxu0 0
        %2262 = vmatpush1.bf16.msra.mxu0 0
        %2263 = vmatprep.subr.bf16.mxu0 0
        %2264 = vmatpush1.bf16.msra.mxu0 0
        %2265 = vmatprep.subr.bf16.mxu0 0
        %2266 = vmatpush1.bf16.msra.mxu0 0
        %2267 = vmatprep.subr.bf16.mxu0 0
        %2268 = vmatpush1.bf16.msra.mxu0 0
        %2269 = vmatprep.subr.bf16.mxu0 0
        %2270 = vmatpush1.bf16.msra.mxu0 0
        %2271 = vmatprep.subr.bf16.mxu0 0
        %2272 = vmatpush1.bf16.msra.mxu0 0
        %2273 = vmatprep.subr.bf16.mxu0 0
        %2274 = vmatpush1.bf16.msra.mxu0 0
        %2275 = vmatprep.subr.bf16.mxu0 0
        %2276 = vmatpush1.bf16.msra.mxu0 0
        %2277 = vmatprep.subr.bf16.mxu0 0
        %2278 = vmatpush1.bf16.msra.mxu0 0
        %2279 = vmatprep.subr.bf16.mxu0 0
        %2280 = vmatpush1.bf16.msra.mxu0 0
        %2281 = vmatprep.subr.bf16.mxu0 0
        %2282 = vmatpush1.bf16.msra.mxu0 0
        %2283 = vmatprep.subr.bf16.mxu0 0
        %2284 = vmatpush1.bf16.msra.mxu0 0
        %2285 = vmatprep.subr.bf16.mxu0 0
        %2286 = vmatpush1.bf16.msra.mxu0 0
        %2287 = vmatprep.mubr.bf16.mxu0 0
        %2288 = vmatmul.mubr.bf16.gmra.mrb[0].mxu0 %v966
        %v2289 = vpop.f32.mrb[0].mxu0
        %v2290 = vadd.f32 0.0, %v2289
        %v2291 = vpop.f32.mrb[0].mxu0
        %v2292 = vpop.f32.mrb[0].mxu0
        %v2293 = vadd.f32 0.0, %v2292
        %v2294 = vpop.f32.mrb[0].mxu0
        %2295 = vmatprep.mubr.bf16.mxu0 0
        %2296 = vmatmul.mubr.bf16.gmra.mrb[0].mxu0 %v969
        %v2297 = vpop.f32.mrb[0].mxu0
        %v2298 = vadd.f32 0.0, %v2297
        %v2299 = vpop.f32.mrb[0].mxu0
        %v2300 = vpop.f32.mrb[0].mxu0
        %v2301 = vadd.f32 0.0, %v2300
        %v2302 = vpop.f32.mrb[0].mxu0
        %2303 = vmatprep.mubr.bf16.mxu0 0
        %2304 = vmatmul.mubr.bf16.gmra.mrb[0].mxu0 %v972
        %v2305 = vpop.f32.mrb[0].mxu0
        %v2306 = vadd.f32 0.0, %v2305
        %v2307 = vpop.f32.mrb[0].mxu0
        %v2308 = vpop.f32.mrb[0].mxu0
        %v2309 = vadd.f32 0.0, %v2308
        %v2310 = vpop.f32.mrb[0].mxu0
        %2311 = vmatprep.mubr.bf16.mxu0 0
        %2312 = vmatmul.mubr.bf16.gmra.mrb[0].mxu0 %v975
        %v2313 = vpop.f32.mrb[0].mxu0
        %v2314 = vadd.f32 0.0, %v2313
        %v2315 = vpop.f32.mrb[0].mxu0
        %v2316 = vpop.f32.mrb[0].mxu0
        %v2317 = vadd.f32 0.0, %v2316
        %v2318 = vpop.f32.mrb[0].mxu0
        %2319 = vmatprep.mubr.bf16.mxu0 0
        %2320 = vmatmul.mubr.bf16.gmra.mrb[0].mxu0 %v978
        %v2321 = vpop.f32.mrb[0].mxu0
        %v2322 = vadd.f32 0.0, %v2321
        %v2323 = vpop.f32.mrb[0].mxu0
        %v2324 = vpop.f32.mrb[0].mxu0
        %v2325 = vadd.f32 0.0, %v2324
        %v2326 = vpop.f32.mrb[0].mxu0
        %2327 = vmatprep.mubr.bf16.mxu0 0
        %2328 = vmatmul.mubr.bf16.gmra.mrb[0].mxu0 %v981
        %v2329 = vpop.f32.mrb[0].mxu0
        %v2330 = vadd.f32 0.0, %v2329
        %v2331 = vpop.f32.mrb[0].mxu0
        %v2332 = vpop.f32.mrb[0].mxu0
        %v2333 = vadd.f32 0.0, %v2332
        %v2334 = vpop.f32.mrb[0].mxu0
        %2335 = vmatprep.mubr.bf16.mxu0 0
        %2336 = vmatmul.mubr.bf16.gmra.mrb[0].mxu0 %v984
        %v2337 = vpop.f32.mrb[0].mxu0
        %v2338 = vadd.f32 0.0, %v2337
        %v2339 = vpop.f32.mrb[0].mxu0
        %v2340 = vpop.f32.mrb[0].mxu0
        %v2341 = vadd.f32 0.0, %v2340
        %v2342 = vpop.f32.mrb[0].mxu0
        %2343 = vmatprep.mubr.bf16.mxu0 0
        %2344 = vmatmul.mubr.bf16.gmra.mrb[0].mxu0 %v987
        %v2345 = vpop.f32.mrb[0].mxu0
        %v2346 = vadd.f32 0.0, %v2345
        %v2347 = vpop.f32.mrb[0].mxu0
        %v2348 = vpop.f32.mrb[0].mxu0
        %v2349 = vadd.f32 0.0, %v2348
        %v2350 = vpop.f32.mrb[0].mxu0
        %2351 = vmatprep.mubr.bf16.mxu0 0
        %2352 = vmatmul.mubr.bf16.gmra.mrb[0].mxu0 %v990
        %v2353 = vpop.f32.mrb[0].mxu0
        %v2354 = vadd.f32 0.0, %v2353
        %v2355 = vpop.f32.mrb[0].mxu0
        %v2356 = vpop.f32.mrb[0].mxu0
        %v2357 = vadd.f32 0.0, %v2356
        %v2358 = vpop.f32.mrb[0].mxu0
        %2359 = vmatprep.mubr.bf16.mxu0 0
        %2360 = vmatmul.mubr.bf16.gmra.mrb[0].mxu0 %v993
        %v2361 = vpop.f32.mrb[0].mxu0
        %v2362 = vadd.f32 0.0, %v2361
        %v2363 = vpop.f32.mrb[0].mxu0
        %v2364 = vpop.f32.mrb[0].mxu0
        %v2365 = vadd.f32 0.0, %v2364
        %v2366 = vpop.f32.mrb[0].mxu0
        %2367 = vmatprep.mubr.bf16.mxu0 0
        %2368 = vmatmul.mubr.bf16.gmra.mrb[0].mxu0 %v996
        %v2369 = vpop.f32.mrb[0].mxu0
        %v2370 = vadd.f32 0.0, %v2369
        %v2371 = vpop.f32.mrb[0].mxu0
        %v2372 = vpop.f32.mrb[0].mxu0
        %v2373 = vadd.f32 0.0, %v2372
        %v2374 = vpop.f32.mrb[0].mxu0
        %2375 = vmatprep.mubr.bf16.mxu0 0
        %2376 = vmatmul.mubr.bf16.gmra.mrb[0].mxu0 %v999
        %v2377 = vpop.f32.mrb[0].mxu0
        %v2378 = vadd.f32 0.0, %v2377
        %v2379 = vpop.f32.mrb[0].mxu0
        %v2380 = vpop.f32.mrb[0].mxu0
        %v2381 = vadd.f32 0.0, %v2380
        %v2382 = vpop.f32.mrb[0].mxu0
        %2383 = vmatprep.mubr.bf16.mxu0 0
        %2384 = vmatmul.mubr.bf16.gmra.mrb[0].mxu0 %v1002
        %v2385 = vpop.f32.mrb[0].mxu0
        %v2386 = vadd.f32 0.0, %v2385
        %v2387 = vpop.f32.mrb[0].mxu0
        %v2388 = vpop.f32.mrb[0].mxu0
        %v2389 = vadd.f32 0.0, %v2388
        %v2390 = vpop.f32.mrb[0].mxu0
        %2391 = vmatprep.mubr.bf16.mxu0 0
        %2392 = vmatmul.mubr.bf16.gmra.mrb[0].mxu0 %v1005
        %v2393 = vpop.f32.mrb[0].mxu0
        %v2394 = vadd.f32 0.0, %v2393
        %v2395 = vpop.f32.mrb[0].mxu0
        %v2396 = vpop.f32.mrb[0].mxu0
        %v2397 = vadd.f32 0.0, %v2396
        %v2398 = vpop.f32.mrb[0].mxu0
        %2399 = vmatprep.mubr.bf16.mxu0 0
        %2400 = vmatmul.mubr.bf16.gmra.mrb[0].mxu0 %v1604
        %v2401 = vpop.f32.mrb[0].mxu0
        %v2402 = vadd.f32 0.0, %v2401
        %v2403 = vpop.f32.mrb[0].mxu0
        %v2404 = vpop.f32.mrb[0].mxu0
        %v2405 = vadd.f32 0.0, %v2404
        %v2406 = vpop.f32.mrb[0].mxu0
        %2407 = vmatprep.mubr.bf16.mxu0 0
        %2408 = vmatmul.mubr.bf16.gmra.mrb[0].mxu0 %v2250
        %v2409 = vpop.f32.mrb[0].mxu0
        %v2410 = vadd.f32 0.0, %v2409
        %v2411 = vpop.f32.mrb[0].mxu0
        %v2412 = vpop.f32.mrb[0].mxu0
        %v2413 = vadd.f32 0.0, %v2412
        %v2414 = vpop.f32.mrb[0].mxu0
        %2415 = vdwg.mxu0
        %v2416 = vadd.f32 %v2210, %v2290
        %v2417 = vadd.f32 %v2211, %v2293
        %v2418 = vadd.f32 %v2212, %v2298
        %v2419 = vadd.f32 %v2213, %v2301
        %v2420 = vadd.f32 %v2214, %v2306
        %v2421 = vadd.f32 %v2215, %v2309
        %v2422 = vadd.f32 %v2216, %v2314
        %v2423 = vadd.f32 %v2217, %v2317
        %v2424 = vadd.f32 %v2218, %v2322
        %v2425 = vadd.f32 %v2219, %v2325
        %v2426 = vadd.f32 %v2220, %v2330
        %v2427 = vadd.f32 %v2221, %v2333
        %v2428 = vadd.f32 %v2222, %v2338
        %v2429 = vadd.f32 %v2223, %v2341
        %v2430 = vadd.f32 %v2224, %v2346
        %v2431 = vadd.f32 %v2225, %v2349
        %v2432 = vadd.f32 %v2226, %v2354
        %v2433 = vadd.f32 %v2227, %v2357
        %v2434 = vadd.f32 %v2228, %v2362
        %v2435 = vadd.f32 %v2229, %v2365
        %v2436 = vadd.f32 %v2230, %v2370
        %v2437 = vadd.f32 %v2231, %v2373
        %v2438 = vadd.f32 %v2232, %v2378
        %v2439 = vadd.f32 %v2233, %v2381
        %v2440 = vadd.f32 %v2234, %v2386
        %v2441 = vadd.f32 %v2235, %v2389
        %v2442 = vadd.f32 %v2236, %v2394
        %v2443 = vadd.f32 %v2237, %v2397
        %v2444 = vadd.f32 %v2238, %v2402
        %v2445 = vadd.f32 %v2239, %v2405
        %v2446 = vadd.f32 %v2240, %v2410
        %v2447 = vadd.f32 %v2241, %v2413
        %v2449 = vshrl.u32 %v221, 16
        %v2451 = vrot.slane %v2449, 4
        %v2452 = vshll.u32 %v221, 16
        %v2454 = vrot.slane %v2452, 5
        %v2455 = vor.u32 %v2451, %v2454
        %v2456 = vrot.slane %v2455, 4
        %v2458 = vshll.u32 %v222, 16
        %v2460 = vrot.slane %v2458, 5
        %v2461 = vsel %vm227, %v2456, %v2460
        %v2462 = vshrl.u32 %v222, 16
        %v2464 = vrot.slane %v2462, 4
        %v2465 = vor.u32 %v2464, %v2460
        %v2466 = vrot.slane %v2465, 4
        %v2468 = vshll.u32 %v223, 16
        %v2470 = vrot.slane %v2468, 5
        %v2471 = vsel %vm227, %v2466, %v2470
        %s2472 = scalar_lea.vmem %s1, 14
        %v2473 = vld [vmem:[%s2472] sm:$0x3]
        %v2474 = vunpack.c.l.b16 %v2461
        %v2475 = vunpack.c.l.b16 %v2471
        %v2476 = vpack.c.b16 %v2475, %v2474
        %v2478 = vsel %vm662, %v2476, 0
        %v2481 = vand.u32 %v2473, %v714
        %2483 = vmatprep.subr.bf16.mxu0 0
        %2484 = vmatpush1.bf16.msra.mxu0 %v2481
        %2485 = vmatprep.subr.bf16.mxu0 0
        %2486 = vmatpush1.bf16.msra.mxu0 0
        %2487 = vmatprep.subr.bf16.mxu0 0
        %2488 = vmatpush1.bf16.msra.mxu0 0
        %2489 = vmatprep.subr.bf16.mxu0 0
        %2490 = vmatpush1.bf16.msra.mxu0 0
        %2491 = vmatprep.subr.bf16.mxu0 0
        %2492 = vmatpush1.bf16.msra.mxu0 0
        %2493 = vmatprep.subr.bf16.mxu0 0
        %2494 = vmatpush1.bf16.msra.mxu0 0
        %2495 = vmatprep.subr.bf16.mxu0 0
        %2496 = vmatpush1.bf16.msra.mxu0 0
        %2497 = vmatprep.subr.bf16.mxu0 0
        %2498 = vmatpush1.bf16.msra.mxu0 0
        %2499 = vmatprep.subr.bf16.mxu0 0
        %2500 = vmatpush1.bf16.msra.mxu0 0
        %2501 = vmatprep.subr.bf16.mxu0 0
        %2502 = vmatpush1.bf16.msra.mxu0 0
        %2503 = vmatprep.subr.bf16.mxu0 0
        %2504 = vmatpush1.bf16.msra.mxu0 0
        %2505 = vmatprep.subr.bf16.mxu0 0
        %2506 = vmatpush1.bf16.msra.mxu0 0
        %2507 = vmatprep.subr.bf16.mxu0 0
        %2508 = vmatpush1.bf16.msra.mxu0 0
        %2509 = vmatprep.subr.bf16.mxu0 0
        %2510 = vmatpush1.bf16.msra.mxu0 0
        %2511 = vmatprep.subr.bf16.mxu0 0
        %2512 = vmatpush1.bf16.msra.mxu0 0
        %2513 = vmatprep.subr.bf16.mxu0 0
        %2514 = vmatpush1.bf16.msra.mxu0 0
        %2515 = vmatprep.mubr.bf16.mxu0 0
        %2516 = vmatmul.mubr.bf16.gmra.mrb[0].mxu0 %v670
        %v2517 = vpop.f32.mrb[0].mxu0
        %v2518 = vadd.f32 0.0, %v2517
        %v2519 = vpop.f32.mrb[0].mxu0
        %v2520 = vpop.f32.mrb[0].mxu0
        %v2521 = vadd.f32 0.0, %v2520
        %v2522 = vpop.f32.mrb[0].mxu0
        %2523 = vmatprep.mubr.bf16.mxu0 0
        %2524 = vmatmul.mubr.bf16.gmra.mrb[0].mxu0 %v673
        %v2525 = vpop.f32.mrb[0].mxu0
        %v2526 = vadd.f32 0.0, %v2525
        %v2527 = vpop.f32.mrb[0].mxu0
        %v2528 = vpop.f32.mrb[0].mxu0
        %v2529 = vadd.f32 0.0, %v2528
        %v2530 = vpop.f32.mrb[0].mxu0
        %2531 = vmatprep.mubr.bf16.mxu0 0
        %2532 = vmatmul.mubr.bf16.gmra.mrb[0].mxu0 %v676
        %v2533 = vpop.f32.mrb[0].mxu0
        %v2534 = vadd.f32 0.0, %v2533
        %v2535 = vpop.f32.mrb[0].mxu0
        %v2536 = vpop.f32.mrb[0].mxu0
        %v2537 = vadd.f32 0.0, %v2536
        %v2538 = vpop.f32.mrb[0].mxu0
        %2539 = vmatprep.mubr.bf16.mxu0 0
        %2540 = vmatmul.mubr.bf16.gmra.mrb[0].mxu0 %v679
        %v2541 = vpop.f32.mrb[0].mxu0
        %v2542 = vadd.f32 0.0, %v2541
        %v2543 = vpop.f32.mrb[0].mxu0
        %v2544 = vpop.f32.mrb[0].mxu0
        %v2545 = vadd.f32 0.0, %v2544
        %v2546 = vpop.f32.mrb[0].mxu0
        %2547 = vmatprep.mubr.bf16.mxu0 0
        %2548 = vmatmul.mubr.bf16.gmra.mrb[0].mxu0 %v682
        %v2549 = vpop.f32.mrb[0].mxu0
        %v2550 = vadd.f32 0.0, %v2549
        %v2551 = vpop.f32.mrb[0].mxu0
        %v2552 = vpop.f32.mrb[0].mxu0
        %v2553 = vadd.f32 0.0, %v2552
        %v2554 = vpop.f32.mrb[0].mxu0
        %2555 = vmatprep.mubr.bf16.mxu0 0
        %2556 = vmatmul.mubr.bf16.gmra.mrb[0].mxu0 %v685
        %v2557 = vpop.f32.mrb[0].mxu0
        %v2558 = vadd.f32 0.0, %v2557
        %v2559 = vpop.f32.mrb[0].mxu0
        %v2560 = vpop.f32.mrb[0].mxu0
        %v2561 = vadd.f32 0.0, %v2560
        %v2562 = vpop.f32.mrb[0].mxu0
        %2563 = vmatprep.mubr.bf16.mxu0 0
        %2564 = vmatmul.mubr.bf16.gmra.mrb[0].mxu0 %v688
        %v2565 = vpop.f32.mrb[0].mxu0
        %v2566 = vadd.f32 0.0, %v2565
        %v2567 = vpop.f32.mrb[0].mxu0
        %v2568 = vpop.f32.mrb[0].mxu0
        %v2569 = vadd.f32 0.0, %v2568
        %v2570 = vpop.f32.mrb[0].mxu0
        %2571 = vmatprep.mubr.bf16.mxu0 0
        %2572 = vmatmul.mubr.bf16.gmra.mrb[0].mxu0 %v691
        %v2573 = vpop.f32.mrb[0].mxu0
        %v2574 = vadd.f32 0.0, %v2573
        %v2575 = vpop.f32.mrb[0].mxu0
        %v2576 = vpop.f32.mrb[0].mxu0
        %v2577 = vadd.f32 0.0, %v2576
        %v2578 = vpop.f32.mrb[0].mxu0
        %2579 = vmatprep.mubr.bf16.mxu0 0
        %2580 = vmatmul.mubr.bf16.gmra.mrb[0].mxu0 %v694
        %v2581 = vpop.f32.mrb[0].mxu0
        %v2582 = vadd.f32 0.0, %v2581
        %v2583 = vpop.f32.mrb[0].mxu0
        %v2584 = vpop.f32.mrb[0].mxu0
        %v2585 = vadd.f32 0.0, %v2584
        %v2586 = vpop.f32.mrb[0].mxu0
        %2587 = vmatprep.mubr.bf16.mxu0 0
        %2588 = vmatmul.mubr.bf16.gmra.mrb[0].mxu0 %v697
        %v2589 = vpop.f32.mrb[0].mxu0
        %v2590 = vadd.f32 0.0, %v2589
        %v2591 = vpop.f32.mrb[0].mxu0
        %v2592 = vpop.f32.mrb[0].mxu0
        %v2593 = vadd.f32 0.0, %v2592
        %v2594 = vpop.f32.mrb[0].mxu0
        %2595 = vmatprep.mubr.bf16.mxu0 0
        %2596 = vmatmul.mubr.bf16.gmra.mrb[0].mxu0 %v700
        %v2597 = vpop.f32.mrb[0].mxu0
        %v2598 = vadd.f32 0.0, %v2597
        %v2599 = vpop.f32.mrb[0].mxu0
        %v2600 = vpop.f32.mrb[0].mxu0
        %v2601 = vadd.f32 0.0, %v2600
        %v2602 = vpop.f32.mrb[0].mxu0
        %2603 = vmatprep.mubr.bf16.mxu0 0
        %2604 = vmatmul.mubr.bf16.gmra.mrb[0].mxu0 %v703
        %v2605 = vpop.f32.mrb[0].mxu0
        %v2606 = vadd.f32 0.0, %v2605
        %v2607 = vpop.f32.mrb[0].mxu0
        %v2608 = vpop.f32.mrb[0].mxu0
        %v2609 = vadd.f32 0.0, %v2608
        %v2610 = vpop.f32.mrb[0].mxu0
        %2611 = vmatprep.mubr.bf16.mxu0 0
        %2612 = vmatmul.mubr.bf16.gmra.mrb[0].mxu0 %v706
        %v2613 = vpop.f32.mrb[0].mxu0
        %v2614 = vadd.f32 0.0, %v2613
        %v2615 = vpop.f32.mrb[0].mxu0
        %v2616 = vpop.f32.mrb[0].mxu0
        %v2617 = vadd.f32 0.0, %v2616
        %v2618 = vpop.f32.mrb[0].mxu0
        %2619 = vmatprep.mubr.bf16.mxu0 0
        %2620 = vmatmul.mubr.bf16.gmra.mrb[0].mxu0 %v709
        %v2621 = vpop.f32.mrb[0].mxu0
        %v2622 = vadd.f32 0.0, %v2621
        %v2623 = vpop.f32.mrb[0].mxu0
        %v2624 = vpop.f32.mrb[0].mxu0
        %v2625 = vadd.f32 0.0, %v2624
        %v2626 = vpop.f32.mrb[0].mxu0
        %2627 = vmatprep.mubr.bf16.mxu0 0
        %2628 = vmatmul.mubr.bf16.gmra.mrb[0].mxu0 %v1832
        %v2629 = vpop.f32.mrb[0].mxu0
        %v2630 = vadd.f32 0.0, %v2629
        %v2631 = vpop.f32.mrb[0].mxu0
        %v2632 = vpop.f32.mrb[0].mxu0
        %v2633 = vadd.f32 0.0, %v2632
        %v2634 = vpop.f32.mrb[0].mxu0
        %2635 = vmatprep.mubr.bf16.mxu0 0
        %2636 = vmatmul.mubr.bf16.gmra.mrb[0].mxu0 %v2478
        %v2637 = vpop.f32.mrb[0].mxu0
        %v2638 = vadd.f32 0.0, %v2637
        %v2639 = vpop.f32.mrb[0].mxu0
        %v2640 = vpop.f32.mrb[0].mxu0
        %v2641 = vadd.f32 0.0, %v2640
        %v2642 = vpop.f32.mrb[0].mxu0
        %2643 = vdwg.mxu0
        %v2644 = vadd.f32 %v2416, %v2518
        %v2645 = vadd.f32 %v2417, %v2521
        %v2646 = vadd.f32 %v2418, %v2526
        %v2647 = vadd.f32 %v2419, %v2529
        %v2648 = vadd.f32 %v2420, %v2534
        %v2649 = vadd.f32 %v2421, %v2537
        %v2650 = vadd.f32 %v2422, %v2542
        %v2651 = vadd.f32 %v2423, %v2545
        %v2652 = vadd.f32 %v2424, %v2550
        %v2653 = vadd.f32 %v2425, %v2553
        %v2654 = vadd.f32 %v2426, %v2558
        %v2655 = vadd.f32 %v2427, %v2561
        %v2656 = vadd.f32 %v2428, %v2566
        %v2657 = vadd.f32 %v2429, %v2569
        %v2658 = vadd.f32 %v2430, %v2574
        %v2659 = vadd.f32 %v2431, %v2577
        %v2660 = vadd.f32 %v2432, %v2582
        %v2661 = vadd.f32 %v2433, %v2585
        %v2662 = vadd.f32 %v2434, %v2590
        %v2663 = vadd.f32 %v2435, %v2593
        %v2664 = vadd.f32 %v2436, %v2598
        %v2665 = vadd.f32 %v2437, %v2601
        %v2666 = vadd.f32 %v2438, %v2606
        %v2667 = vadd.f32 %v2439, %v2609
        %v2668 = vadd.f32 %v2440, %v2614
        %v2669 = vadd.f32 %v2441, %v2617
        %v2670 = vadd.f32 %v2442, %v2622
        %v2671 = vadd.f32 %v2443, %v2625
        %v2672 = vadd.f32 %v2444, %v2630
        %v2673 = vadd.f32 %v2445, %v2633
        %v2674 = vadd.f32 %v2446, %v2638
        %v2675 = vadd.f32 %v2447, %v2641
        %v2677 = vrot.slane %v221, 5
        %v2678 = vrot.slane %v2677, 4
        %v2679 = vrot.slane %v222, 5
        %v2680 = vsel %vm1189, %v2678, %v2679
        %v2681 = vrot.slane %v2679, 4
        %v2682 = vrot.slane %v223, 5
        %v2683 = vsel %vm1189, %v2681, %v2682
        %s2684 = scalar_lea.vmem %s1, 16
        %v2685 = vld [vmem:[%s2684] sm:$0x3]
        %v2686 = vunpack.c.l.b16 %v2680
        %v2687 = vunpack.c.l.b16 %v2683
        %v2688 = vpack.c.b16 %v2687, %v2686
        %v2690 = vsel %vm662, %v2688, 0
        %v2693 = vand.u32 %v2685, %v714
        %2695 = vmatprep.subr.bf16.mxu0 0
        %2696 = vmatpush1.bf16.msra.mxu0 %v2693
        %2697 = vmatprep.subr.bf16.mxu0 0
        %2698 = vmatpush1.bf16.msra.mxu0 0
        %2699 = vmatprep.subr.bf16.mxu0 0
        %2700 = vmatpush1.bf16.msra.mxu0 0
        %2701 = vmatprep.subr.bf16.mxu0 0
        %2702 = vmatpush1.bf16.msra.mxu0 0
        %2703 = vmatprep.subr.bf16.mxu0 0
        %2704 = vmatpush1.bf16.msra.mxu0 0
        %2705 = vmatprep.subr.bf16.mxu0 0
        %2706 = vmatpush1.bf16.msra.mxu0 0
        %2707 = vmatprep.subr.bf16.mxu0 0
        %2708 = vmatpush1.bf16.msra.mxu0 0
        %2709 = vmatprep.subr.bf16.mxu0 0
        %2710 = vmatpush1.bf16.msra.mxu0 0
        %2711 = vmatprep.subr.bf16.mxu0 0
        %2712 = vmatpush1.bf16.msra.mxu0 0
        %2713 = vmatprep.subr.bf16.mxu0 0
        %2714 = vmatpush1.bf16.msra.mxu0 0
        %2715 = vmatprep.subr.bf16.mxu0 0
        %2716 = vmatpush1.bf16.msra.mxu0 0
        %2717 = vmatprep.subr.bf16.mxu0 0
        %2718 = vmatpush1.bf16.msra.mxu0 0
        %2719 = vmatprep.subr.bf16.mxu0 0
        %2720 = vmatpush1.bf16.msra.mxu0 0
        %2721 = vmatprep.subr.bf16.mxu0 0
        %2722 = vmatpush1.bf16.msra.mxu0 0
        %2723 = vmatprep.subr.bf16.mxu0 0
        %2724 = vmatpush1.bf16.msra.mxu0 0
        %2725 = vmatprep.subr.bf16.mxu0 0
        %2726 = vmatpush1.bf16.msra.mxu0 0
        %2727 = vmatprep.mubr.bf16.mxu0 0
        %2728 = vmatmul.mubr.bf16.gmra.mrb[0].mxu0 %v1359
        %v2729 = vpop.f32.mrb[0].mxu0
        %v2730 = vadd.f32 0.0, %v2729
        %v2731 = vpop.f32.mrb[0].mxu0
        %v2732 = vpop.f32.mrb[0].mxu0
        %v2733 = vadd.f32 0.0, %v2732
        %v2734 = vpop.f32.mrb[0].mxu0
        %2735 = vmatprep.mubr.bf16.mxu0 0
        %2736 = vmatmul.mubr.bf16.gmra.mrb[0].mxu0 %v1362
        %v2737 = vpop.f32.mrb[0].mxu0
        %v2738 = vadd.f32 0.0, %v2737
        %v2739 = vpop.f32.mrb[0].mxu0
        %v2740 = vpop.f32.mrb[0].mxu0
        %v2741 = vadd.f32 0.0, %v2740
        %v2742 = vpop.f32.mrb[0].mxu0
        %2743 = vmatprep.mubr.bf16.mxu0 0
        %2744 = vmatmul.mubr.bf16.gmra.mrb[0].mxu0 %v1365
        %v2745 = vpop.f32.mrb[0].mxu0
        %v2746 = vadd.f32 0.0, %v2745
        %v2747 = vpop.f32.mrb[0].mxu0
        %v2748 = vpop.f32.mrb[0].mxu0
        %v2749 = vadd.f32 0.0, %v2748
        %v2750 = vpop.f32.mrb[0].mxu0
        %2751 = vmatprep.mubr.bf16.mxu0 0
        %2752 = vmatmul.mubr.bf16.gmra.mrb[0].mxu0 %v1368
        %v2753 = vpop.f32.mrb[0].mxu0
        %v2754 = vadd.f32 0.0, %v2753
        %v2755 = vpop.f32.mrb[0].mxu0
        %v2756 = vpop.f32.mrb[0].mxu0
        %v2757 = vadd.f32 0.0, %v2756
        %v2758 = vpop.f32.mrb[0].mxu0
        %2759 = vmatprep.mubr.bf16.mxu0 0
        %2760 = vmatmul.mubr.bf16.gmra.mrb[0].mxu0 %v1371
        %v2761 = vpop.f32.mrb[0].mxu0
        %v2762 = vadd.f32 0.0, %v2761
        %v2763 = vpop.f32.mrb[0].mxu0
        %v2764 = vpop.f32.mrb[0].mxu0
        %v2765 = vadd.f32 0.0, %v2764
        %v2766 = vpop.f32.mrb[0].mxu0
        %2767 = vmatprep.mubr.bf16.mxu0 0
        %2768 = vmatmul.mubr.bf16.gmra.mrb[0].mxu0 %v1374
        %v2769 = vpop.f32.mrb[0].mxu0
        %v2770 = vadd.f32 0.0, %v2769
        %v2771 = vpop.f32.mrb[0].mxu0
        %v2772 = vpop.f32.mrb[0].mxu0
        %v2773 = vadd.f32 0.0, %v2772
        %v2774 = vpop.f32.mrb[0].mxu0
        %2775 = vmatprep.mubr.bf16.mxu0 0
        %2776 = vmatmul.mubr.bf16.gmra.mrb[0].mxu0 %v1377
        %v2777 = vpop.f32.mrb[0].mxu0
        %v2778 = vadd.f32 0.0, %v2777
        %v2779 = vpop.f32.mrb[0].mxu0
        %v2780 = vpop.f32.mrb[0].mxu0
        %v2781 = vadd.f32 0.0, %v2780
        %v2782 = vpop.f32.mrb[0].mxu0
        %2783 = vmatprep.mubr.bf16.mxu0 0
        %2784 = vmatmul.mubr.bf16.gmra.mrb[0].mxu0 %v1380
        %v2785 = vpop.f32.mrb[0].mxu0
        %v2786 = vadd.f32 0.0, %v2785
        %v2787 = vpop.f32.mrb[0].mxu0
        %v2788 = vpop.f32.mrb[0].mxu0
        %v2789 = vadd.f32 0.0, %v2788
        %v2790 = vpop.f32.mrb[0].mxu0
        %2791 = vmatprep.mubr.bf16.mxu0 0
        %2792 = vmatmul.mubr.bf16.gmra.mrb[0].mxu0 %v1383
        %v2793 = vpop.f32.mrb[0].mxu0
        %v2794 = vadd.f32 0.0, %v2793
        %v2795 = vpop.f32.mrb[0].mxu0
        %v2796 = vpop.f32.mrb[0].mxu0
        %v2797 = vadd.f32 0.0, %v2796
        %v2798 = vpop.f32.mrb[0].mxu0
        %2799 = vmatprep.mubr.bf16.mxu0 0
        %2800 = vmatmul.mubr.bf16.gmra.mrb[0].mxu0 %v1386
        %v2801 = vpop.f32.mrb[0].mxu0
        %v2802 = vadd.f32 0.0, %v2801
        %v2803 = vpop.f32.mrb[0].mxu0
        %v2804 = vpop.f32.mrb[0].mxu0
        %v2805 = vadd.f32 0.0, %v2804
        %v2806 = vpop.f32.mrb[0].mxu0
        %2807 = vmatprep.mubr.bf16.mxu0 0
        %2808 = vmatmul.mubr.bf16.gmra.mrb[0].mxu0 %v1389
        %v2809 = vpop.f32.mrb[0].mxu0
        %v2810 = vadd.f32 0.0, %v2809
        %v2811 = vpop.f32.mrb[0].mxu0
        %v2812 = vpop.f32.mrb[0].mxu0
        %v2813 = vadd.f32 0.0, %v2812
        %v2814 = vpop.f32.mrb[0].mxu0
        %2815 = vmatprep.mubr.bf16.mxu0 0
        %2816 = vmatmul.mubr.bf16.gmra.mrb[0].mxu0 %v1392
        %v2817 = vpop.f32.mrb[0].mxu0
        %v2818 = vadd.f32 0.0, %v2817
        %v2819 = vpop.f32.mrb[0].mxu0
        %v2820 = vpop.f32.mrb[0].mxu0
        %v2821 = vadd.f32 0.0, %v2820
        %v2822 = vpop.f32.mrb[0].mxu0
        %2823 = vmatprep.mubr.bf16.mxu0 0
        %2824 = vmatmul.mubr.bf16.gmra.mrb[0].mxu0 %v1395
        %v2825 = vpop.f32.mrb[0].mxu0
        %v2826 = vadd.f32 0.0, %v2825
        %v2827 = vpop.f32.mrb[0].mxu0
        %v2828 = vpop.f32.mrb[0].mxu0
        %v2829 = vadd.f32 0.0, %v2828
        %v2830 = vpop.f32.mrb[0].mxu0
        %2831 = vmatprep.mubr.bf16.mxu0 0
        %2832 = vmatmul.mubr.bf16.gmra.mrb[0].mxu0 %v1398
        %v2833 = vpop.f32.mrb[0].mxu0
        %v2834 = vadd.f32 0.0, %v2833
        %v2835 = vpop.f32.mrb[0].mxu0
        %v2836 = vpop.f32.mrb[0].mxu0
        %v2837 = vadd.f32 0.0, %v2836
        %v2838 = vpop.f32.mrb[0].mxu0
        %2839 = vmatprep.mubr.bf16.mxu0 0
        %2840 = vmatmul.mubr.bf16.gmra.mrb[0].mxu0 %v2044
        %v2841 = vpop.f32.mrb[0].mxu0
        %v2842 = vadd.f32 0.0, %v2841
        %v2843 = vpop.f32.mrb[0].mxu0
        %v2844 = vpop.f32.mrb[0].mxu0
        %v2845 = vadd.f32 0.0, %v2844
        %v2846 = vpop.f32.mrb[0].mxu0
        %2847 = vmatprep.mubr.bf16.mxu0 0
        %2848 = vmatmul.mubr.bf16.gmra.mrb[0].mxu0 %v2690
        %v2849 = vpop.f32.mrb[0].mxu0
        %v2850 = vadd.f32 0.0, %v2849
        %v2851 = vpop.f32.mrb[0].mxu0
        %v2852 = vpop.f32.mrb[0].mxu0
        %v2853 = vadd.f32 0.0, %v2852
        %v2854 = vpop.f32.mrb[0].mxu0
        %2855 = vdwg.mxu0
        %v2856 = vadd.f32 %v2644, %v2730
        %v2857 = vadd.f32 %v2645, %v2733
        %v2858 = vadd.f32 %v2646, %v2738
        %v2859 = vadd.f32 %v2647, %v2741
        %v2860 = vadd.f32 %v2648, %v2746
        %v2861 = vadd.f32 %v2649, %v2749
        %v2862 = vadd.f32 %v2650, %v2754
        %v2863 = vadd.f32 %v2651, %v2757
        %v2864 = vadd.f32 %v2652, %v2762
        %v2865 = vadd.f32 %v2653, %v2765
        %v2866 = vadd.f32 %v2654, %v2770
        %v2867 = vadd.f32 %v2655, %v2773
        %v2868 = vadd.f32 %v2656, %v2778
        %v2869 = vadd.f32 %v2657, %v2781
        %v2870 = vadd.f32 %v2658, %v2786
        %v2871 = vadd.f32 %v2659, %v2789
        %v2872 = vadd.f32 %v2660, %v2794
        %v2873 = vadd.f32 %v2661, %v2797
        %v2874 = vadd.f32 %v2662, %v2802
        %v2875 = vadd.f32 %v2663, %v2805
        %v2876 = vadd.f32 %v2664, %v2810
        %v2877 = vadd.f32 %v2665, %v2813
        %v2878 = vadd.f32 %v2666, %v2818
        %v2879 = vadd.f32 %v2667, %v2821
        %v2880 = vadd.f32 %v2668, %v2826
        %v2881 = vadd.f32 %v2669, %v2829
        %v2882 = vadd.f32 %v2670, %v2834
        %v2883 = vadd.f32 %v2671, %v2837
        %v2884 = vadd.f32 %v2672, %v2842
        %v2885 = vadd.f32 %v2673, %v2845
        %v2886 = vadd.f32 %v2674, %v2850
        %v2887 = vadd.f32 %v2675, %v2853
        %v2888 = vld [vmem:[%s2] sm:$0x1]
        %v2890 = vlaneseq
        %v2891 = vshrl.u32 %v2890, 7
        %v2892 = vsub.s32 0, %v2891
        %v2893 = vrot.slane %v2888, %v2892
        %v2895 = vadd.f32 %v2856, %v2893
        %v2896 = vadd.f32 %v2857, %v2893
        %v2897 = vadd.f32 %v2858, %v2893
        %v2898 = vadd.f32 %v2859, %v2893
        %v2899 = vadd.f32 %v2860, %v2893
        %v2900 = vadd.f32 %v2861, %v2893
        %v2901 = vadd.f32 %v2862, %v2893
        %v2902 = vadd.f32 %v2863, %v2893
        %v2903 = vadd.f32 %v2864, %v2893
        %v2904 = vadd.f32 %v2865, %v2893
        %v2905 = vadd.f32 %v2866, %v2893
        %v2906 = vadd.f32 %v2867, %v2893
        %v2907 = vadd.f32 %v2868, %v2893
        %v2908 = vadd.f32 %v2869, %v2893
        %v2909 = vadd.f32 %v2870, %v2893
        %v2910 = vadd.f32 %v2871, %v2893
        %v2911 = vadd.f32 %v2872, %v2893
        %v2912 = vadd.f32 %v2873, %v2893
        %v2913 = vadd.f32 %v2874, %v2893
        %v2914 = vadd.f32 %v2875, %v2893
        %v2915 = vadd.f32 %v2876, %v2893
        %v2916 = vadd.f32 %v2877, %v2893
        %v2917 = vadd.f32 %v2878, %v2893
        %v2918 = vadd.f32 %v2879, %v2893
        %v2919 = vadd.f32 %v2880, %v2893
        %v2920 = vadd.f32 %v2881, %v2893
        %v2921 = vadd.f32 %v2882, %v2893
        %v2922 = vadd.f32 %v2883, %v2893
        %v2923 = vadd.f32 %v2884, %v2893
        %v2924 = vadd.f32 %v2885, %v2893
        %v2925 = vadd.f32 %v2886, %v2893
        %v2926 = vadd.f32 %v2887, %v2893
        %vm2927 = vcmask 261120
        %2928 = vst.msk [vmem:[%s163] sm:$0xff] %vm2927, %v2895
        %2929 = vst.msk [vmem:[%s163 + $0x8] sm:$0xff] %vm2927, %v2896
        %2930 = vst.msk [vmem:[%s163 + $0x10] sm:$0xff] %vm2927, %v2897
        %2931 = vst.msk [vmem:[%s163 + $0x18] sm:$0xff] %vm2927, %v2898
        %2932 = vst.msk [vmem:[%s163 + $0x20] sm:$0xff] %vm2927, %v2899
        %2933 = vst.msk [vmem:[%s163 + $0x28] sm:$0xff] %vm2927, %v2900
        %2934 = vst.msk [vmem:[%s163 + $0x30] sm:$0xff] %vm2927, %v2901
        %2935 = vst.msk [vmem:[%s163 + $0x38] sm:$0xff] %vm2927, %v2902
        %2936 = vst.msk [vmem:[%s163 + $0x40] sm:$0xff] %vm2927, %v2903
        %2937 = vst.msk [vmem:[%s163 + $0x48] sm:$0xff] %vm2927, %v2904
        %2938 = vst.msk [vmem:[%s163 + $0x50] sm:$0xff] %vm2927, %v2905
        %2939 = vst.msk [vmem:[%s163 + $0x58] sm:$0xff] %vm2927, %v2906
        %2940 = vst.msk [vmem:[%s163 + $0x60] sm:$0xff] %vm2927, %v2907
        %2941 = vst.msk [vmem:[%s163 + $0x68] sm:$0xff] %vm2927, %v2908
        %2942 = vst.msk [vmem:[%s163 + $0x70] sm:$0xff] %vm2927, %v2909
        %2943 = vst.msk [vmem:[%s163 + $0x78] sm:$0xff] %vm2927, %v2910
        %2944 = vst.msk [vmem:[%s163 + $0x80] sm:$0xff] %vm2927, %v2911
        %2945 = vst.msk [vmem:[%s163 + $0x88] sm:$0xff] %vm2927, %v2912
        %2946 = vst.msk [vmem:[%s163 + $0x90] sm:$0xff] %vm2927, %v2913
        %2947 = vst.msk [vmem:[%s163 + $0x98] sm:$0xff] %vm2927, %v2914
        %2948 = vst.msk [vmem:[%s163 + $0xa0] sm:$0xff] %vm2927, %v2915
        %2949 = vst.msk [vmem:[%s163 + $0xa8] sm:$0xff] %vm2927, %v2916
        %2950 = vst.msk [vmem:[%s163 + $0xb0] sm:$0xff] %vm2927, %v2917
        %2951 = vst.msk [vmem:[%s163 + $0xb8] sm:$0xff] %vm2927, %v2918
        %2952 = vst.msk [vmem:[%s163 + $0xc0] sm:$0xff] %vm2927, %v2919
        %2953 = vst.msk [vmem:[%s163 + $0xc8] sm:$0xff] %vm2927, %v2920
        %2954 = vst.msk [vmem:[%s163 + $0xd0] sm:$0xff] %vm2927, %v2921
        %2955 = vst.msk [vmem:[%s163 + $0xd8] sm:$0xff] %vm2927, %v2922
        %2956 = vst.msk [vmem:[%s163 + $0xe0] sm:$0xff] %vm2927, %v2923
        %2957 = vst.msk [vmem:[%s163 + $0xe8] sm:$0xff] %vm2927, %v2924
        %2958 = vst.msk [vmem:[%s163 + $0xf0] sm:$0xff] %vm2927, %v2925
        %2959 = vst.msk [vmem:[%s163 + $0xf8] sm:$0xff] %vm2927, %v2926
        %s2960 = sand.u32 %s93, 1
        %s2961 = scalar_lea.sflag [#allocation3], %s2960
        %s2962 = sand.u32 %s93, 1
        %s2963 = smul.addr %s2962, 256
        %s2964 = scalar_lea.vmem [#allocation2], %s2963
        // Predicated region
        $region33: #{pallas_conv3x3.1} parent=31 // pred_check
          %p2965 = pneg %p103
        $region34: #{pallas_conv3x3.1} parent=31 // pred_check_branch
          %2967 = sbr.rel (%p2965) target = $region36
        $region35: #{pallas_conv3x3.1} parent=31 // pred_region
          %s2969 = ssub.s32 4096, 4096
          %2970 = vsyncadd %s2961, %s2969
          %s2971 = smul.addr %s17, 32
          %s2972 = smul.addr %s2971, 128
          %s2973 = scalar_lea.hbm %s3, %s2972
          %s2974 = sshll.u32 %s2964, 4
          %s2975 = int_to_ptr.vmem [resolvable:$true] %s2974
          %2980 = dma.vmem_to_hbm [thread:$0]  %s2975, 4096, %s2973, %s2961, 128, 128, 8
        $region36: #{pallas_conv3x3.1} parent=31 // pred_fallthru
          _
      $region32: #{pallas_conv3x3.1} parent=5 // pred_fallthru
        _
      %p2981 = scmp.le.s32.totalorder 2, %s12
      // Predicated region
      $region37: #{pallas_conv3x3.1} parent=5 // pred_check
        %p2982 = pneg %p2981
      $region38: #{pallas_conv3x3.1} parent=5 // pred_check_branch
        %2984 = sbr.rel (%p2982) target = $region40
      $region39: #{pallas_conv3x3.1} parent=5 // pred_region
        %s2985 = ssub.s32 %s12, 2
        // Predicated region
        $region41: #{pallas_conv3x3.1} parent=39 // pred_check
          %p2986 = pneg %p109
        $region42: #{pallas_conv3x3.1} parent=39 // pred_check_branch
          %2988 = sbr.rel (%p2986) target = $region44
        $region43: #{pallas_conv3x3.1} parent=39 // pred_region
          %s2989 = sand.u32 %s94, 1
          %s2990 = scalar_lea.sflag [#allocation3], %s2989
          %s2991 = sand.u32 %s94, 1
          %s2992 = smul.addr %s2991, 256
          %s2993 = scalar_lea.vmem [#allocation2], %s2992
          %2994 = dma.done %s2990, 4096
        $region44: #{pallas_conv3x3.1} parent=39 // pred_fallthru
          _
      $region40: #{pallas_conv3x3.1} parent=5 // pred_fallthru
        _
    $region6: #{pallas_conv3x3.1} parent=1 // loop_footer
      %s16 = sadd.s32 1, %s12
    $region7: #{pallas_conv3x3.1} parent=1 // loop_footer_branch
      %11 = sbr.rel target = $region3
    $region8: #{pallas_conv3x3.1} parent=1 // loop_exit
      _
    %2995 = vsyncpa [#allocation3], 1
    %s2996 = scalar_lea.sflag [#allocation3], 1
    %2997 = vsyncpa %s2996, 1

</llo_original>
